<compile_context>
chip_gen: v7x
topology: tpu7x:2x2x1
jax: 0.10.0
libtpu: 0.0.40
codegen_flags: <defaults>
</compile_context>

<pallas_src>
import jax
import jax.numpy as jnp
import numpy as np
from jax import lax
from jax.experimental import pallas as pl
from jax.experimental.pallas import tpu as pltpu


# ---------------------------------------------------------------------------
# In-kernel helper: 3x3 conv over the lane-fused layout.
#   y       : (NB, H, W*Cin)    f32 activations (this stage's conv input)
#   pad_ref : (NB, H+2, W*Cin)  f32 VMEM scratch (H halo; W halo is encoded in T)
#   t_ref   : (3, W*Cin, W*Cout) block-Toeplitz weights, one matrix per kernel row
# returns acc : (NB*H, W*Cout) f32 raw conv output (no bias).
# ---------------------------------------------------------------------------
def _conv3x3_rows(y, pad_ref, t_ref):
    NB, H, WC_in = y.shape
    WC_out = t_ref.shape[2]
    zero_row = jnp.zeros((NB, 1, WC_in), jnp.float32)
    pad_ref[:, 0:1, :] = zero_row              # top halo row
    pad_ref[:, H + 1:H + 2, :] = zero_row      # bottom halo row
    pad_ref[:, 1:H + 1, :] = y                 # interior
    acc = jnp.zeros((NB * H, WC_out), jnp.float32)
    for dy in range(3):                        # 3 MXU matmuls: K=W*Cin, N=W*Cout
        rows = pad_ref[:, dy:dy + H, :].reshape(NB * H, WC_in)
        acc = acc + jnp.dot(rows, t_ref[dy], preferred_element_type=jnp.float32)
    return acc


def _emit_conv_and_stats(acc, out_ref, sum_ref, sq_ref):
    NB, H, WC_out = out_ref.shape
    out_ref[...] = acc.reshape(NB, H, WC_out).astype(out_ref.dtype)
    sum_ref[...] = jnp.sum(acc, axis=0).reshape(1, 1, WC_out)   # per-step partial
    sq_ref[...] = jnp.sum(acc * acc, axis=0).reshape(1, 1, WC_out)


# ---------------------------------------------------------------------------
# Kernel 1: conv1 + per-step partial BN statistics.
# ---------------------------------------------------------------------------
def _conv_stats_kernel(x_ref, t_ref, out_ref, sum_ref, sq_ref, pad_ref):
    acc = _conv3x3_rows(x_ref[...].astype(jnp.float32), pad_ref, t_ref)
    _emit_conv_and_stats(acc, out_ref, sum_ref, sq_ref)


# ---------------------------------------------------------------------------
# Kernel 2: previous stage's BN + ReLU fused into this conv's input load,
#           then conv + per-step partial BN statistics.
# ---------------------------------------------------------------------------
def _bnrelu_conv_stats_kernel(x_ref, scale_ref, shift_ref, t_ref,
                              out_ref, sum_ref, sq_ref, pad_ref):
    scale = scale_ref[...][:, None, :]         # (1, 1, W*Cin)
    shift = shift_ref[...][:, None, :]
    y = jnp.maximum(x_ref[...].astype(jnp.float32) * scale + shift, 0.0)
    acc = _conv3x3_rows(y, pad_ref, t_ref)
    _emit_conv_and_stats(acc, out_ref, sum_ref, sq_ref)


# ---------------------------------------------------------------------------
# Kernel 3: final BN + ReLU (lane-dense elementwise pass).
# ---------------------------------------------------------------------------
def _bn_relu_kernel(x_ref, scale_ref, shift_ref, o_ref):
    scale = scale_ref[...][:, None, :]
    shift = shift_ref[...][:, None, :]
    o_ref[...] = jnp.maximum(
        x_ref[...].astype(jnp.float32) * scale + shift, 0.0).astype(o_ref.dtype)


# ---------------------------------------------------------------------------
# Wrapper-side helpers.
# ---------------------------------------------------------------------------
def _toeplitz_weights(w_hwio, W):
    """(3,3,Cin,Cout) HWIO weights -> (3, W*Cin, W*Cout) block-Toeplitz matrices.

    T[dy][wq*Cin + ci, w*Cout + co] = w[dy, wq - w + 1, ci, co] when the tap lies
    inside the 3x3 window, else 0.  Multiplying a fused image row by T[dy] performs
    the dx/ci part of the conv; the W-direction zero padding is encoded by the band
    structure (out-of-band taps simply never appear).
    """
    kh, kw, Cin, Cout = w_hwio.shape
    mats = []
    for dy in range(kh):
        t = jnp.zeros((W, Cin, W, Cout), w_hwio.dtype)
        for dx in range(kw):
            e = jnp.eye(W, W, k=1 - dx, dtype=w_hwio.dtype)   # e[wq, w]=1 iff wq==w+dx-1
            t = t + e[:, None, :, None] * w_hwio[dy, dx][None, :, None, :]
        mats.append(t.reshape(W * Cin, W * Cout))
    return jnp.stack(mats, axis=0)


def _bn_scale_shift(psum, psq, gamma, beta, count, W, C, eps):
    csum = psum.sum(axis=(0, 1)).reshape(W, C).sum(axis=0)
    csq = psq.sum(axis=(0, 1)).reshape(W, C).sum(axis=0)
    mean = csum / count
    var = csq / count - mean * mean            # biased variance (BN training mode)
    inv = gamma / jnp.sqrt(var + eps)
    scale = inv
    shift = beta - mean * inv
    # Tile per-channel vectors to the fused (W*C) lane layout: index w*C + c -> [c].
    return (jnp.tile(scale, W).reshape(1, W * C),
            jnp.tile(shift, W).reshape(1, W * C))


def _conv_stage(x_fused, t_mats, scale_t=None, shift_t=None, *,
                out_dtype=jnp.bfloat16, batch_tile=None):
    """One fused stage: [optional BN+ReLU of previous stage] -> conv3x3 -> stats."""
    N, H, WC_in = x_fused.shape
    assert t_mats.shape[1] == WC_in
    WC_out = t_mats.shape[2]
    NB = N if batch_tile is None else batch_tile
    assert N % NB == 0
    NT = N // NB

    act_spec = pl.BlockSpec((NB, H, WC_in), lambda i: (i, 0, 0))
    t_spec = pl.BlockSpec((3, WC_in, WC_out), lambda i: (0, 0, 0))
    if scale_t is None:
        kernel = _conv_stats_kernel
        in_specs = [act_spec, t_spec]
        args = (x_fused, t_mats)
    else:
        kernel = _bnrelu_conv_stats_kernel
        vec_spec = pl.BlockSpec((1, WC_in), lambda i: (0, 0))
        in_specs = [act_spec, vec_spec, vec_spec, t_spec]
        args = (x_fused, scale_t, shift_t, t_mats)

    out, psum, psq = pl.pallas_call(
        kernel,
        out_shape=(jax.ShapeDtypeStruct((N, H, WC_out), out_dtype),
                   jax.ShapeDtypeStruct((NT, 1, WC_out), jnp.float32),
                   jax.ShapeDtypeStruct((NT, 1, WC_out), jnp.float32)),
        grid_spec=pltpu.PrefetchScalarGridSpec(
            num_scalar_prefetch=0,
            grid=(NT,),
            in_specs=in_specs,
            out_specs=[pl.BlockSpec((NB, H, WC_out), lambda i: (i, 0, 0)),
                       pl.BlockSpec((1, 1, WC_out), lambda i: (i, 0, 0)),
                       pl.BlockSpec((1, 1, WC_out), lambda i: (i, 0, 0))],
            scratch_shapes=[pltpu.VMEM((NB, H + 2, WC_in), jnp.float32)]),
        compiler_params=pltpu.CompilerParams(
            dimension_semantics=("parallel",)),   # partial stats -> no serial accumulator
    )(*args)
    return out, psum, psq


# ---------------------------------------------------------------------------
# ConvBlock forward: (conv -> bn(train stats) -> relu) x 2, NCHW in / NCHW out.
# ---------------------------------------------------------------------------
def conv_block_forward(x_nchw, params, eps=1e-5, batch_tile=None):
    N, Cin, H, W = x_nchw.shape
    C1 = params["w1"].shape[3]
    C2 = params["w2"].shape[3]

    # NCHW -> lane-fused NHWC (N, H, W*Cin)
    xf = jnp.transpose(x_nchw, (0, 2, 3, 1)).reshape(N, H, W * Cin)

    t1 = _toeplitz_weights(params["w1"], W)
    t2 = _toeplitz_weights(params["w2"], W)
    count = float(N * H * W)

    # Stage 1: conv1 + partial BN stats.  Conv bias is omitted on purpose: training
    # mode BatchNorm subtracts the batch mean, which cancels the bias exactly.
    c1, ps1, pq1 = _conv_stage(xf, t1, batch_tile=batch_tile)
    s1, sh1 = _bn_scale_shift(ps1, pq1, params["g1"], params["be1"], count, W, C1, eps)

    # Stage 2: BN1 + ReLU1 fused into conv2's input load, then conv2 + partial stats.
    c2, ps2, pq2 = _conv_stage(c1, t2, s1, sh1, batch_tile=batch_tile)
    s2, sh2 = _bn_scale_shift(ps2, pq2, params["g2"], params["be2"], count, W, C2, eps)

    # Final fused BN2 + ReLU2 with a lane-dense (N, H, W*C2) output block.
    NB = N if batch_tile is None else batch_tile
    NT = N // NB
    yf = pl.pallas_call(
        _bn_relu_kernel,
        out_shape=jax.ShapeDtypeStruct((N, H, W * C2), jnp.float32),
        grid_spec=pltpu.PrefetchScalarGridSpec(
            num_scalar_prefetch=0,
            grid=(NT,),
            in_specs=[pl.BlockSpec((NB, H, W * C2), lambda i: (i, 0, 0)),
                      pl.BlockSpec((1, W * C2), lambda i: (0, 0)),
                      pl.BlockSpec((1, W * C2), lambda i: (0, 0))],
            out_specs=pl.BlockSpec((NB, H, W * C2), lambda i: (i, 0, 0))),
        compiler_params=pltpu.CompilerParams(dimension_semantics=("parallel",)),
    )(c2, s2, sh2)
    # TODO(synk): the final NHWC->NCHW permute is left to XLA (tiny tensor here);
    # fuse it into the output kernel if an NCHW HBM layout is required at scale.
    return jnp.transpose(yf.reshape(N, H, W, C2), (0, 3, 1, 2))


# ---------------------------------------------------------------------------
# Pure-JAX reference (mimics the PyTorch module in training mode), NCHW.
# ---------------------------------------------------------------------------
def _ref_stage(x, w_oihw, b, g, be, eps=1e-5):
    y = lax.conv_general_dilated(x, w_oihw, (1, 1), ((1, 1), (1, 1)),
                                 dimension_numbers=("NCHW", "OIHW", "NCHW"))
    y = y + b[None, :, None, None]
    mean = jnp.mean(y, axis=(0, 2, 3))
    var = jnp.mean((y - mean[None, :, None, None]) ** 2, axis=(0, 2, 3))
    y = (y - mean[None, :, None, None]) / jnp.sqrt(var + eps)[None, :, None, None]
    y = y * g[None, :, None, None] + be[None, :, None, None]
    return jnp.maximum(y, 0.0)


def conv_block_reference(x_nchw, params):
    w1 = jnp.transpose(params["w1"], (3, 2, 0, 1))   # HWIO -> OIHW
    w2 = jnp.transpose(params["w2"], (3, 2, 0, 1))
    y = _ref_stage(x_nchw, w1, params["b1"], params["g1"], params["be1"])
    y = _ref_stage(y, w2, params["b2"], params["g2"], params["be2"])
    return y


if __name__ == "__main__":
    # Small shapes consistent with the module: ConvBlock(in_channels=4, out_channels=8)
    N, Cin, Cout, H, W = 2, 4, 8, 16, 16

    key = jax.random.PRNGKey(0)
    kx, kw1, kb1, kw2, kb2, kg1, kg2, kbe1, kbe2 = jax.random.split(key, 9)

    x = jax.random.normal(kx, (N, Cin, H, W), jnp.float32)

    params = {
        # conv weights in HWIO (3, 3, Cin, Cout)
        "w1": 0.3 * jax.random.normal(kw1, (3, 3, Cin, Cout), jnp.float32),
        "b1": 0.1 * jax.random.normal(kb1, (Cout,), jnp.float32),
        "g1": 1.0 + 0.1 * jax.random.normal(kg1, (Cout,), jnp.float32),
        "be1": 0.1 * jax.random.normal(kbe1, (Cout,), jnp.float32),
        "w2": 0.3 * jax.random.normal(kw2, (3, 3, Cout, Cout), jnp.float32),
        "b2": 0.1 * jax.random.normal(kb2, (Cout,), jnp.float32),
        "g2": 1.0 + 0.1 * jax.random.normal(kg2, (Cout,), jnp.float32),
        "be2": 0.1 * jax.random.normal(kbe2, (Cout,), jnp.float32),
    }

    fwd = jax.jit(conv_block_forward)
    out = jax.block_until_ready(fwd(x, params))
    ref = jax.block_until_ready(conv_block_reference(x, params))

    assert out.shape == (N, Cout, H, W), out.shape
    np.testing.assert_allclose(np.asarray(out), np.asarray(ref), rtol=2e-2, atol=2e-2)

    print("KERNEL_OK")
</pallas_src>

<mosaic_0001>
module attributes {stable_mosaic.version = 11 : i64} {
  func.func @_conv_stats_kernel(%arg0: i32, %arg1: memref<2x16x64xf32, #tpu.memory_space<vmem>>, %arg2: memref<3x64x128xf32, #tpu.memory_space<vmem>>, %arg3: memref<2x16x128xbf16, #tpu.memory_space<vmem>>, %arg4: memref<1x1x128xf32, #tpu.memory_space<vmem>>, %arg5: memref<1x1x128xf32, #tpu.memory_space<vmem>>, %arg6: memref<2x18x64xf32, #tpu.memory_space<vmem>>) attributes {dimension_semantics = [#tpu.dimension_semantics<parallel>], iteration_bounds = array<i64: 1>, scalar_prefetch = 0 : i64, scratch_operands = 1 : i64, tpu.core_type = #tpu.core_type<tc>, window_params = [{transform_indices = @transform_0, window_bounds = array<i64: 2, 16, 64>}, {pipeline_mode = #tpu.pipeline_mode<synchronous>, transform_indices = @transform_1, window_bounds = array<i64: 3, 64, 128>}, {transform_indices = @transform_2, window_bounds = array<i64: 2, 16, 128>}, {transform_indices = @transform_3, window_bounds = array<i64: 1, 1, 128>}, {transform_indices = @transform_4, window_bounds = array<i64: 1, 1, 128>}]} {
    %c0 = arith.constant 0 : index
    %c0_0 = arith.constant 0 : index
    %c0_1 = arith.constant 0 : index
    %0 = vector.load %arg1[%c0, %c0_0, %c0_1] : memref<2x16x64xf32, #tpu.memory_space<vmem>>, vector<2x16x64xf32>
    %cst = arith.constant 0.000000e+00 : f32
    %1 = vector.broadcast %cst : f32 to vector<2x1x64xf32>
    %c0_2 = arith.constant 0 : index
    %c0_3 = arith.constant 0 : index
    %c0_4 = arith.constant 0 : index
    %2 = vector.load %arg6[%c0_2, %c0_3, %c0_4] : memref<2x18x64xf32, #tpu.memory_space<vmem>>, vector<2x1x64xf32>
    tpu.vector_store %arg6[%c0_2, %c0_3, %c0_4], %1 {strides = array<i32>} : memref<2x18x64xf32, #tpu.memory_space<vmem>>, vector<2x1x64xf32>,
    %c0_5 = arith.constant 0 : index
    %c17 = arith.constant 17 : index
    %c0_6 = arith.constant 0 : index
    %3 = vector.load %arg6[%c0_5, %c17, %c0_6] : memref<2x18x64xf32, #tpu.memory_space<vmem>>, vector<2x1x64xf32>
    tpu.vector_store %arg6[%c0_5, %c17, %c0_6], %1 {strides = array<i32>} : memref<2x18x64xf32, #tpu.memory_space<vmem>>, vector<2x1x64xf32>,
    %c0_7 = arith.constant 0 : index
    %c1 = arith.constant 1 : index
    %c0_8 = arith.constant 0 : index
    %4 = vector.load %arg6[%c0_7, %c1, %c0_8] : memref<2x18x64xf32, #tpu.memory_space<vmem>>, vector<2x16x64xf32>
    tpu.vector_store %arg6[%c0_7, %c1, %c0_8], %0 {strides = array<i32>} : memref<2x18x64xf32, #tpu.memory_space<vmem>>, vector<2x16x64xf32>,
    %cst_9 = arith.constant 0.000000e+00 : f32
    %5 = vector.broadcast %cst_9 : f32 to vector<32x128xf32>
    %c0_10 = arith.constant 0 : index
    %c0_11 = arith.constant 0 : index
    %c0_12 = arith.constant 0 : index
    %6 = vector.load %arg6[%c0_10, %c0_11, %c0_12] : memref<2x18x64xf32, #tpu.memory_space<vmem>>, vector<2x16x64xf32>
    %7 = vector.shape_cast %6 : vector<2x16x64xf32> to vector<32x64xf32>
    %c0_13 = arith.constant 0 : index
    %c0_14 = arith.constant 0 : index
    %c0_15 = arith.constant 0 : index
    %8 = vector.load %arg2[%c0_13, %c0_14, %c0_15] : memref<3x64x128xf32, #tpu.memory_space<vmem>>, vector<1x64x128xf32>
    %9 = vector.shape_cast %8 : vector<1x64x128xf32> to vector<64x128xf32>
    %cst_16 = arith.constant dense<0.000000e+00> : vector<32x128xf32>
    %10 = tpu.matmul %7, %9, %cst_16 {dimension_numbers = #tpu.dot_dimension_numbers<[1], [0], [0], [1], [0, 0, 1, 1], [], []>} : vector<32x64xf32>, vector<64x128xf32>, vector<32x128xf32> -> vector<32x128xf32>
    %11 = arith.addf %5, %10 : vector<32x128xf32>
    %c0_17 = arith.constant 0 : index
    %c1_18 = arith.constant 1 : index
    %c0_19 = arith.constant 0 : index
    %12 = vector.load %arg6[%c0_17, %c1_18, %c0_19] : memref<2x18x64xf32, #tpu.memory_space<vmem>>, vector<2x16x64xf32>
    %13 = vector.shape_cast %12 : vector<2x16x64xf32> to vector<32x64xf32>
    %c1_20 = arith.constant 1 : index
    %c0_21 = arith.constant 0 : index
    %c0_22 = arith.constant 0 : index
    %14 = vector.load %arg2[%c1_20, %c0_21, %c0_22] : memref<3x64x128xf32, #tpu.memory_space<vmem>>, vector<1x64x128xf32>
    %15 = vector.shape_cast %14 : vector<1x64x128xf32> to vector<64x128xf32>
    %cst_23 = arith.constant dense<0.000000e+00> : vector<32x128xf32>
    %16 = tpu.matmul %13, %15, %cst_23 {dimension_numbers = #tpu.dot_dimension_numbers<[1], [0], [0], [1], [0, 0, 1, 1], [], []>} : vector<32x64xf32>, vector<64x128xf32>, vector<32x128xf32> -> vector<32x128xf32>
    %17 = arith.addf %11, %16 : vector<32x128xf32>
    %c0_24 = arith.constant 0 : index
    %c2 = arith.constant 2 : index
    %c0_25 = arith.constant 0 : index
    %18 = vector.load %arg6[%c0_24, %c2, %c0_25] : memref<2x18x64xf32, #tpu.memory_space<vmem>>, vector<2x16x64xf32>
    %19 = vector.shape_cast %18 : vector<2x16x64xf32> to vector<32x64xf32>
    %c2_26 = arith.constant 2 : index
    %c0_27 = arith.constant 0 : index
    %c0_28 = arith.constant 0 : index
    %20 = vector.load %arg2[%c2_26, %c0_27, %c0_28] : memref<3x64x128xf32, #tpu.memory_space<vmem>>, vector<1x64x128xf32>
    %21 = vector.shape_cast %20 : vector<1x64x128xf32> to vector<64x128xf32>
    %cst_29 = arith.constant dense<0.000000e+00> : vector<32x128xf32>
    %22 = tpu.matmul %19, %21, %cst_29 {dimension_numbers = #tpu.dot_dimension_numbers<[1], [0], [0], [1], [0, 0, 1, 1], [], []>} : vector<32x64xf32>, vector<64x128xf32>, vector<32x128xf32> -> vector<32x128xf32>
    %23 = arith.addf %17, %22 : vector<32x128xf32>
    %24 = vector.shape_cast %23 : vector<32x128xf32> to vector<2x16x128xf32>
    %25 = arith.truncf %24 : vector<2x16x128xf32> to vector<2x16x128xbf16>
    %c0_30 = arith.constant 0 : index
    %c0_31 = arith.constant 0 : index
    %c0_32 = arith.constant 0 : index
    %26 = vector.load %arg3[%c0_30, %c0_31, %c0_32] : memref<2x16x128xbf16, #tpu.memory_space<vmem>>, vector<2x16x128xbf16>
    tpu.vector_store %arg3[%c0_30, %c0_31, %c0_32], %25 {strides = array<i32>} : memref<2x16x128xbf16, #tpu.memory_space<vmem>>, vector<2x16x128xbf16>,
    %cst_33 = arith.constant dense<0.000000e+00> : vector<128xf32>
    %27 = vector.multi_reduction <add>, %23, %cst_33 [0] : vector<32x128xf32> to vector<128xf32>
    %28 = vector.shape_cast %27 : vector<128xf32> to vector<1x1x128xf32>
    %c0_34 = arith.constant 0 : index
    %c0_35 = arith.constant 0 : index
    %c0_36 = arith.constant 0 : index
    %29 = vector.load %arg4[%c0_34, %c0_35, %c0_36] : memref<1x1x128xf32, #tpu.memory_space<vmem>>, vector<1x1x128xf32>
    tpu.vector_store %arg4[%c0_34, %c0_35, %c0_36], %28 {strides = array<i32>} : memref<1x1x128xf32, #tpu.memory_space<vmem>>, vector<1x1x128xf32>,
    %30 = arith.mulf %23, %23 : vector<32x128xf32>
    %cst_37 = arith.constant dense<0.000000e+00> : vector<128xf32>
    %31 = vector.multi_reduction <add>, %30, %cst_37 [0] : vector<32x128xf32> to vector<128xf32>
    %32 = vector.shape_cast %31 : vector<128xf32> to vector<1x1x128xf32>
    %c0_38 = arith.constant 0 : index
    %c0_39 = arith.constant 0 : index
    %c0_40 = arith.constant 0 : index
    %33 = vector.load %arg5[%c0_38, %c0_39, %c0_40] : memref<1x1x128xf32, #tpu.memory_space<vmem>>, vector<1x1x128xf32>
    tpu.vector_store %arg5[%c0_38, %c0_39, %c0_40], %32 {strides = array<i32>} : memref<1x1x128xf32, #tpu.memory_space<vmem>>, vector<1x1x128xf32>,
    return
  }
  func.func @transform_0(%arg0: i32) -> (i32, i32, i32) {
    %c0_i32 = arith.constant 0 : i32
    %c0_i32_0 = arith.constant 0 : i32
    %c0_i32_1 = arith.constant 0 : i32
    return %arg0, %c0_i32, %c0_i32_0 : i32, i32, i32
  }
  func.func @transform_1(%arg0: i32) -> (i32, i32, i32) {
    %c0_i32 = arith.constant 0 : i32
    %c0_i32_0 = arith.constant 0 : i32
    %c0_i32_1 = arith.constant 0 : i32
    %c0_i32_2 = arith.constant 0 : i32
    return %c0_i32, %c0_i32_0, %c0_i32_1 : i32, i32, i32
  }
  func.func @transform_2(%arg0: i32) -> (i32, i32, i32) {
    %c0_i32 = arith.constant 0 : i32
    %c0_i32_0 = arith.constant 0 : i32
    %c0_i32_1 = arith.constant 0 : i32
    return %arg0, %c0_i32, %c0_i32_0 : i32, i32, i32
  }
  func.func @transform_3(%arg0: i32) -> (i32, i32, i32) {
    %c0_i32 = arith.constant 0 : i32
    %c0_i32_0 = arith.constant 0 : i32
    %c0_i32_1 = arith.constant 0 : i32
    return %arg0, %c0_i32, %c0_i32_0 : i32, i32, i32
  }
  func.func @transform_4(%arg0: i32) -> (i32, i32, i32) {
    %c0_i32 = arith.constant 0 : i32
    %c0_i32_0 = arith.constant 0 : i32
    %c0_i32_1 = arith.constant 0 : i32
    return %arg0, %c0_i32, %c0_i32_0 : i32, i32, i32
  }
}

module attributes {stable_mosaic.version = 11 : i64} {
  func.func @_bnrelu_conv_stats_kernel(%arg0: i32, %arg1: memref<2x16x128xbf16, #tpu.memory_space<vmem>>, %arg2: memref<1x128xf32, #tpu.memory_space<vmem>>, %arg3: memref<1x128xf32, #tpu.memory_space<vmem>>, %arg4: memref<3x128x128xf32, #tpu.memory_space<vmem>>, %arg5: memref<2x16x128xbf16, #tpu.memory_space<vmem>>, %arg6: memref<1x1x128xf32, #tpu.memory_space<vmem>>, %arg7: memref<1x1x128xf32, #tpu.memory_space<vmem>>, %arg8: memref<2x18x128xf32, #tpu.memory_space<vmem>>) attributes {dimension_semantics = [#tpu.dimension_semantics<parallel>], iteration_bounds = array<i64: 1>, scalar_prefetch = 0 : i64, scratch_operands = 1 : i64, tpu.core_type = #tpu.core_type<tc>, window_params = [{transform_indices = @transform_0, window_bounds = array<i64: 2, 16, 128>}, {pipeline_mode = #tpu.pipeline_mode<synchronous>, transform_indices = @transform_1, window_bounds = array<i64: 1, 128>}, {pipeline_mode = #tpu.pipeline_mode<synchronous>, transform_indices = @transform_2, window_bounds = array<i64: 1, 128>}, {pipeline_mode = #tpu.pipeline_mode<synchronous>, transform_indices = @transform_3, window_bounds = array<i64: 3, 128, 128>}, {transform_indices = @transform_4, window_bounds = array<i64: 2, 16, 128>}, {transform_indices = @transform_5, window_bounds = array<i64: 1, 1, 128>}, {transform_indices = @transform_6, window_bounds = array<i64: 1, 1, 128>}]} {
    %c0 = arith.constant 0 : index
    %c0_0 = arith.constant 0 : index
    %0 = vector.load %arg2[%c0, %c0_0] : memref<1x128xf32, #tpu.memory_space<vmem>>, vector<1x128xf32>
    %1 = vector.shape_cast %0 : vector<1x128xf32> to vector<1x1x128xf32>
    %c0_1 = arith.constant 0 : index
    %c0_2 = arith.constant 0 : index
    %2 = vector.load %arg3[%c0_1, %c0_2] : memref<1x128xf32, #tpu.memory_space<vmem>>, vector<1x128xf32>
    %3 = vector.shape_cast %2 : vector<1x128xf32> to vector<1x1x128xf32>
    %c0_3 = arith.constant 0 : index
    %c0_4 = arith.constant 0 : index
    %c0_5 = arith.constant 0 : index
    %4 = vector.load %arg1[%c0_3, %c0_4, %c0_5] : memref<2x16x128xbf16, #tpu.memory_space<vmem>>, vector<2x16x128xbf16>
    %5 = arith.extf %4 : vector<2x16x128xbf16> to vector<2x16x128xf32>
    %6 = vector.broadcast %1 : vector<1x1x128xf32> to vector<2x16x128xf32>
    %7 = arith.mulf %5, %6 : vector<2x16x128xf32>
    %8 = vector.broadcast %3 : vector<1x1x128xf32> to vector<2x16x128xf32>
    %9 = arith.addf %7, %8 : vector<2x16x128xf32>
    %cst = arith.constant 0.000000e+00 : f32
    %10 = vector.broadcast %cst : f32 to vector<2x16x128xf32>
    %11 = arith.maximumf %9, %10 : vector<2x16x128xf32>
    %cst_6 = arith.constant 0.000000e+00 : f32
    %12 = vector.broadcast %cst_6 : f32 to vector<2x1x128xf32>
    %c0_7 = arith.constant 0 : index
    %c0_8 = arith.constant 0 : index
    %c0_9 = arith.constant 0 : index
    %13 = vector.load %arg8[%c0_7, %c0_8, %c0_9] : memref<2x18x128xf32, #tpu.memory_space<vmem>>, vector<2x1x128xf32>
    tpu.vector_store %arg8[%c0_7, %c0_8, %c0_9], %12 {strides = array<i32>} : memref<2x18x128xf32, #tpu.memory_space<vmem>>, vector<2x1x128xf32>,
    %c0_10 = arith.constant 0 : index
    %c17 = arith.constant 17 : index
    %c0_11 = arith.constant 0 : index
    %14 = vector.load %arg8[%c0_10, %c17, %c0_11] : memref<2x18x128xf32, #tpu.memory_space<vmem>>, vector<2x1x128xf32>
    tpu.vector_store %arg8[%c0_10, %c17, %c0_11], %12 {strides = array<i32>} : memref<2x18x128xf32, #tpu.memory_space<vmem>>, vector<2x1x128xf32>,
    %c0_12 = arith.constant 0 : index
    %c1 = arith.constant 1 : index
    %c0_13 = arith.constant 0 : index
    %15 = vector.load %arg8[%c0_12, %c1, %c0_13] : memref<2x18x128xf32, #tpu.memory_space<vmem>>, vector<2x16x128xf32>
    tpu.vector_store %arg8[%c0_12, %c1, %c0_13], %11 {strides = array<i32>} : memref<2x18x128xf32, #tpu.memory_space<vmem>>, vector<2x16x128xf32>,
    %cst_14 = arith.constant 0.000000e+00 : f32
    %16 = vector.broadcast %cst_14 : f32 to vector<32x128xf32>
    %c0_15 = arith.constant 0 : index
    %c0_16 = arith.constant 0 : index
    %c0_17 = arith.constant 0 : index
    %17 = vector.load %arg8[%c0_15, %c0_16, %c0_17] : memref<2x18x128xf32, #tpu.memory_space<vmem>>, vector<2x16x128xf32>
    %18 = vector.shape_cast %17 : vector<2x16x128xf32> to vector<32x128xf32>
    %c0_18 = arith.constant 0 : index
    %c0_19 = arith.constant 0 : index
    %c0_20 = arith.constant 0 : index
    %19 = vector.load %arg4[%c0_18, %c0_19, %c0_20] : memref<3x128x128xf32, #tpu.memory_space<vmem>>, vector<1x128x128xf32>
    %20 = vector.shape_cast %19 : vector<1x128x128xf32> to vector<128x128xf32>
    %cst_21 = arith.constant dense<0.000000e+00> : vector<32x128xf32>
    %21 = tpu.matmul %18, %20, %cst_21 {dimension_numbers = #tpu.dot_dimension_numbers<[1], [0], [0], [1], [0, 0, 1, 1], [], []>} : vector<32x128xf32>, vector<128x128xf32>, vector<32x128xf32> -> vector<32x128xf32>
    %22 = arith.addf %16, %21 : vector<32x128xf32>
    %c0_22 = arith.constant 0 : index
    %c1_23 = arith.constant 1 : index
    %c0_24 = arith.constant 0 : index
    %23 = vector.load %arg8[%c0_22, %c1_23, %c0_24] : memref<2x18x128xf32, #tpu.memory_space<vmem>>, vector<2x16x128xf32>
    %24 = vector.shape_cast %23 : vector<2x16x128xf32> to vector<32x128xf32>
    %c1_25 = arith.constant 1 : index
    %c0_26 = arith.constant 0 : index
    %c0_27 = arith.constant 0 : index
    %25 = vector.load %arg4[%c1_25, %c0_26, %c0_27] : memref<3x128x128xf32, #tpu.memory_space<vmem>>, vector<1x128x128xf32>
    %26 = vector.shape_cast %25 : vector<1x128x128xf32> to vector<128x128xf32>
    %cst_28 = arith.constant dense<0.000000e+00> : vector<32x128xf32>
    %27 = tpu.matmul %24, %26, %cst_28 {dimension_numbers = #tpu.dot_dimension_numbers<[1], [0], [0], [1], [0, 0, 1, 1], [], []>} : vector<32x128xf32>, vector<128x128xf32>, vector<32x128xf32> -> vector<32x128xf32>
    %28 = arith.addf %22, %27 : vector<32x128xf32>
    %c0_29 = arith.constant 0 : index
    %c2 = arith.constant 2 : index
    %c0_30 = arith.constant 0 : index
    %29 = vector.load %arg8[%c0_29, %c2, %c0_30] : memref<2x18x128xf32, #tpu.memory_space<vmem>>, vector<2x16x128xf32>
    %30 = vector.shape_cast %29 : vector<2x16x128xf32> to vector<32x128xf32>
    %c2_31 = arith.constant 2 : index
    %c0_32 = arith.constant 0 : index
    %c0_33 = arith.constant 0 : index
    %31 = vector.load %arg4[%c2_31, %c0_32, %c0_33] : memref<3x128x128xf32, #tpu.memory_space<vmem>>, vector<1x128x128xf32>
    %32 = vector.shape_cast %31 : vector<1x128x128xf32> to vector<128x128xf32>
    %cst_34 = arith.constant dense<0.000000e+00> : vector<32x128xf32>
    %33 = tpu.matmul %30, %32, %cst_34 {dimension_numbers = #tpu.dot_dimension_numbers<[1], [0], [0], [1], [0, 0, 1, 1], [], []>} : vector<32x128xf32>, vector<128x128xf32>, vector<32x128xf32> -> vector<32x128xf32>
    %34 = arith.addf %28, %33 : vector<32x128xf32>
    %35 = vector.shape_cast %34 : vector<32x128xf32> to vector<2x16x128xf32>
    %36 = arith.truncf %35 : vector<2x16x128xf32> to vector<2x16x128xbf16>
    %c0_35 = arith.constant 0 : index
    %c0_36 = arith.constant 0 : index
    %c0_37 = arith.constant 0 : index
    %37 = vector.load %arg5[%c0_35, %c0_36, %c0_37] : memref<2x16x128xbf16, #tpu.memory_space<vmem>>, vector<2x16x128xbf16>
    tpu.vector_store %arg5[%c0_35, %c0_36, %c0_37], %36 {strides = array<i32>} : memref<2x16x128xbf16, #tpu.memory_space<vmem>>, vector<2x16x128xbf16>,
    %cst_38 = arith.constant dense<0.000000e+00> : vector<128xf32>
    %38 = vector.multi_reduction <add>, %34, %cst_38 [0] : vector<32x128xf32> to vector<128xf32>
    %39 = vector.shape_cast %38 : vector<128xf32> to vector<1x1x128xf32>
    %c0_39 = arith.constant 0 : index
    %c0_40 = arith.constant 0 : index
    %c0_41 = arith.constant 0 : index
    %40 = vector.load %arg6[%c0_39, %c0_40, %c0_41] : memref<1x1x128xf32, #tpu.memory_space<vmem>>, vector<1x1x128xf32>
    tpu.vector_store %arg6[%c0_39, %c0_40, %c0_41], %39 {strides = array<i32>} : memref<1x1x128xf32, #tpu.memory_space<vmem>>, vector<1x1x128xf32>,
    %41 = arith.mulf %34, %34 : vector<32x128xf32>
    %cst_42 = arith.constant dense<0.000000e+00> : vector<128xf32>
    %42 = vector.multi_reduction <add>, %41, %cst_42 [0] : vector<32x128xf32> to vector<128xf32>
    %43 = vector.shape_cast %42 : vector<128xf32> to vector<1x1x128xf32>
    %c0_43 = arith.constant 0 : index
    %c0_44 = arith.constant 0 : index
    %c0_45 = arith.constant 0 : index
    %44 = vector.load %arg7[%c0_43, %c0_44, %c0_45] : memref<1x1x128xf32, #tpu.memory_space<vmem>>, vector<1x1x128xf32>
    tpu.vector_store %arg7[%c0_43, %c0_44, %c0_45], %43 {strides = array<i32>} : memref<1x1x128xf32, #tpu.memory_space<vmem>>, vector<1x1x128xf32>,
    return
  }
  func.func @transform_0(%arg0: i32) -> (i32, i32, i32) {
    %c0_i32 = arith.constant 0 : i32
    %c0_i32_0 = arith.constant 0 : i32
    %c0_i32_1 = arith.constant 0 : i32
    return %arg0, %c0_i32, %c0_i32_0 : i32, i32, i32
  }
  func.func @transform_1(%arg0: i32) -> (i32, i32) {
    %c0_i32 = arith.constant 0 : i32
    %c0_i32_0 = arith.constant 0 : i32
    %c0_i32_1 = arith.constant 0 : i32
    return %c0_i32, %c0_i32_0 : i32, i32
  }
  func.func @transform_2(%arg0: i32) -> (i32, i32) {
    %c0_i32 = arith.constant 0 : i32
    %c0_i32_0 = arith.constant 0 : i32
    %c0_i32_1 = arith.constant 0 : i32
    return %c0_i32, %c0_i32_0 : i32, i32
  }
  func.func @transform_3(%arg0: i32) -> (i32, i32, i32) {
    %c0_i32 = arith.constant 0 : i32
    %c0_i32_0 = arith.constant 0 : i32
    %c0_i32_1 = arith.constant 0 : i32
    %c0_i32_2 = arith.constant 0 : i32
    return %c0_i32, %c0_i32_0, %c0_i32_1 : i32, i32, i32
  }
  func.func @transform_4(%arg0: i32) -> (i32, i32, i32) {
    %c0_i32 = arith.constant 0 : i32
    %c0_i32_0 = arith.constant 0 : i32
    %c0_i32_1 = arith.constant 0 : i32
    return %arg0, %c0_i32, %c0_i32_0 : i32, i32, i32
  }
  func.func @transform_5(%arg0: i32) -> (i32, i32, i32) {
    %c0_i32 = arith.constant 0 : i32
    %c0_i32_0 = arith.constant 0 : i32
    %c0_i32_1 = arith.constant 0 : i32
    return %arg0, %c0_i32, %c0_i32_0 : i32, i32, i32
  }
  func.func @transform_6(%arg0: i32) -> (i32, i32, i32) {
    %c0_i32 = arith.constant 0 : i32
    %c0_i32_0 = arith.constant 0 : i32
    %c0_i32_1 = arith.constant 0 : i32
    return %arg0, %c0_i32, %c0_i32_0 : i32, i32, i32
  }
}

module attributes {stable_mosaic.version = 11 : i64} {
  func.func @_bn_relu_kernel(%arg0: i32, %arg1: memref<2x16x128xbf16, #tpu.memory_space<vmem>>, %arg2: memref<1x128xf32, #tpu.memory_space<vmem>>, %arg3: memref<1x128xf32, #tpu.memory_space<vmem>>, %arg4: memref<2x16x128xf32, #tpu.memory_space<vmem>>) attributes {dimension_semantics = [#tpu.dimension_semantics<parallel>], iteration_bounds = array<i64: 1>, scalar_prefetch = 0 : i64, scratch_operands = 0 : i64, tpu.core_type = #tpu.core_type<tc>, window_params = [{transform_indices = @transform_0, window_bounds = array<i64: 2, 16, 128>}, {pipeline_mode = #tpu.pipeline_mode<synchronous>, transform_indices = @transform_1, window_bounds = array<i64: 1, 128>}, {pipeline_mode = #tpu.pipeline_mode<synchronous>, transform_indices = @transform_2, window_bounds = array<i64: 1, 128>}, {transform_indices = @transform_3, window_bounds = array<i64: 2, 16, 128>}]} {
    %c0 = arith.constant 0 : index
    %c0_0 = arith.constant 0 : index
    %0 = vector.load %arg2[%c0, %c0_0] : memref<1x128xf32, #tpu.memory_space<vmem>>, vector<1x128xf32>
    %1 = vector.shape_cast %0 : vector<1x128xf32> to vector<1x1x128xf32>
    %c0_1 = arith.constant 0 : index
    %c0_2 = arith.constant 0 : index
    %2 = vector.load %arg3[%c0_1, %c0_2] : memref<1x128xf32, #tpu.memory_space<vmem>>, vector<1x128xf32>
    %3 = vector.shape_cast %2 : vector<1x128xf32> to vector<1x1x128xf32>
    %c0_3 = arith.constant 0 : index
    %c0_4 = arith.constant 0 : index
    %c0_5 = arith.constant 0 : index
    %4 = vector.load %arg1[%c0_3, %c0_4, %c0_5] : memref<2x16x128xbf16, #tpu.memory_space<vmem>>, vector<2x16x128xbf16>
    %5 = arith.extf %4 : vector<2x16x128xbf16> to vector<2x16x128xf32>
    %6 = vector.broadcast %1 : vector<1x1x128xf32> to vector<2x16x128xf32>
    %7 = arith.mulf %5, %6 : vector<2x16x128xf32>
    %8 = vector.broadcast %3 : vector<1x1x128xf32> to vector<2x16x128xf32>
    %9 = arith.addf %7, %8 : vector<2x16x128xf32>
    %cst = arith.constant 0.000000e+00 : f32
    %10 = vector.broadcast %cst : f32 to vector<2x16x128xf32>
    %11 = arith.maximumf %9, %10 : vector<2x16x128xf32>
    %c0_6 = arith.constant 0 : index
    %c0_7 = arith.constant 0 : index
    %c0_8 = arith.constant 0 : index
    %12 = vector.load %arg4[%c0_6, %c0_7, %c0_8] : memref<2x16x128xf32, #tpu.memory_space<vmem>>, vector<2x16x128xf32>
    tpu.vector_store %arg4[%c0_6, %c0_7, %c0_8], %11 {strides = array<i32>} : memref<2x16x128xf32, #tpu.memory_space<vmem>>, vector<2x16x128xf32>,
    return
  }
  func.func @transform_0(%arg0: i32) -> (i32, i32, i32) {
    %c0_i32 = arith.constant 0 : i32
    %c0_i32_0 = arith.constant 0 : i32
    %c0_i32_1 = arith.constant 0 : i32
    return %arg0, %c0_i32, %c0_i32_0 : i32, i32, i32
  }
  func.func @transform_1(%arg0: i32) -> (i32, i32) {
    %c0_i32 = arith.constant 0 : i32
    %c0_i32_0 = arith.constant 0 : i32
    %c0_i32_1 = arith.constant 0 : i32
    return %c0_i32, %c0_i32_0 : i32, i32
  }
  func.func @transform_2(%arg0: i32) -> (i32, i32) {
    %c0_i32 = arith.constant 0 : i32
    %c0_i32_0 = arith.constant 0 : i32
    %c0_i32_1 = arith.constant 0 : i32
    return %c0_i32, %c0_i32_0 : i32, i32
  }
  func.func @transform_3(%arg0: i32) -> (i32, i32, i32) {
    %c0_i32 = arith.constant 0 : i32
    %c0_i32_0 = arith.constant 0 : i32
    %c0_i32_1 = arith.constant 0 : i32
    return %arg0, %c0_i32, %c0_i32_0 : i32, i32, i32
  }
}

</mosaic_0001>

<llo_original>
// kernel: tile.28
$region0: #{tile.28}
  #allocation0 [shape = 's32[1]{0}', space=sflag, size = 0x4, scoped, tag = 'scoped memory for tile.28']
  %s0 = inlined_call_operand.vmem [shape: f32[8], index: 0, kind: input, shape index: {}]
  %s1 = inlined_call_operand.vmem [shape: f32[16,8], index: 1, kind: output, shape index: {}]
  // Predicated region
  $region2: #{tile.28} parent=0 // pred_check
    _
  $region3: #{tile.28} parent=0 // pred_check_branch
    %3 = sbr.rel (0) target = $region5
  $region4: #{tile.28} parent=0 // pred_region
    _
  $region5: #{tile.28} parent=0 // pred_fallthru
    _
  %v4 = vld [vmem:[%s0] ss:$0 sm:$0xff]
  %5 = vst [vmem:[%s1] sm:$0xff] %v4
  %s6 = scalar_lea.vmem %s1, 8
  %7 = vst [vmem:[%s6] sm:$0xff] %v4

// kernel: tile.29
$region0: #{tile.29}
  %s0 = inlined_call_operand.vmem [shape: f32[16,8], index: 0, kind: input, shape index: {}]
  %s1 = inlined_call_operand.vmem [shape: f32[1,128], index: 1, kind: output, shape index: {}]
  $region1: #{tile.29} parent=0
    #allocation0 [shape = 'u8[4096]{0}', space=vmem, size = 0x1000, scoped, tag = 'scoped mem for output reshape']
    %v2 = vld [vmem:[%s0] sm:$0x1]
    %vm3 = vcmask 64512
    %4 = vst.msk [vmem:[#allocation0] sm:$0x1] %vm3, %v2
    %s5 = scalar_lea.vmem %s0, 15
    %v6 = vld [vmem:[%s5] sm:$0x1]
    %7 = vrot.lane.b32.xlu0 %v6, 120
    %v8 = vpop.permute.xlu0 %7
    %vm9 = vcmask 1048512
    %10 = vst.msk [vmem:[#allocation0] sm:$0x1] %vm9, %v8
    %s11 = scalar_lea.vmem %s0, 14
    %v12 = vld [vmem:[%s11] sm:$0x1]
    %13 = vrot.lane.b32.xlu0 %v12, 112
    %v14 = vpop.permute.xlu0 %13
    %vm15 = vcmask 982912
    %16 = vst.msk [vmem:[#allocation0] sm:$0x1] %vm15, %v14
    %s17 = scalar_lea.vmem %s0, 13
    %v18 = vld [vmem:[%s17] sm:$0x1]
    %19 = vrot.lane.b32.xlu0 %v18, 104
    %v20 = vpop.permute.xlu0 %19
    %vm21 = vcmask 917312
    %22 = vst.msk [vmem:[#allocation0] sm:$0x1] %vm21, %v20
    %s23 = scalar_lea.vmem %s0, 12
    %v24 = vld [vmem:[%s23] sm:$0x1]
    %25 = vrot.lane.b32.xlu0 %v24, 96
    %v26 = vpop.permute.xlu0 %25
    %vm27 = vcmask 851712
    %28 = vst.msk [vmem:[#allocation0] sm:$0x1] %vm27, %v26
    %s29 = scalar_lea.vmem %s0, 11
    %v30 = vld [vmem:[%s29] sm:$0x1]
    %31 = vrot.lane.b32.xlu0 %v30, 88
    %v32 = vpop.permute.xlu0 %31
    %vm33 = vcmask 786112
    %34 = vst.msk [vmem:[#allocation0] sm:$0x1] %vm33, %v32
    %s35 = scalar_lea.vmem %s0, 10
    %v36 = vld [vmem:[%s35] sm:$0x1]
    %37 = vrot.lane.b32.xlu0 %v36, 80
    %v38 = vpop.permute.xlu0 %37
    %vm39 = vcmask 720512
    %40 = vst.msk [vmem:[#allocation0] sm:$0x1] %vm39, %v38
    %s41 = scalar_lea.vmem %s0, 9
    %v42 = vld [vmem:[%s41] sm:$0x1]
    %43 = vrot.lane.b32.xlu0 %v42, 72
    %v44 = vpop.permute.xlu0 %43
    %vm45 = vcmask 654912
    %46 = vst.msk [vmem:[#allocation0] sm:$0x1] %vm45, %v44
    %s47 = scalar_lea.vmem %s0, 8
    %v48 = vld [vmem:[%s47] sm:$0x1]
    %49 = vrot.lane.b32.xlu0 %v48, 64
    %v50 = vpop.permute.xlu0 %49
    %vm51 = vcmask 589312
    %52 = vst.msk [vmem:[#allocation0] sm:$0x1] %vm51, %v50
    %s53 = scalar_lea.vmem %s0, 7
    %v54 = vld [vmem:[%s53] sm:$0x1]
    %55 = vrot.lane.b32.xlu0 %v54, 56
    %v56 = vpop.permute.xlu0 %55
    %vm57 = vcmask 523712
    %58 = vst.msk [vmem:[#allocation0] sm:$0x1] %vm57, %v56
    %s59 = scalar_lea.vmem %s0, 6
    %v60 = vld [vmem:[%s59] sm:$0x1]
    %61 = vrot.lane.b32.xlu0 %v60, 48
    %v62 = vpop.permute.xlu0 %61
    %vm63 = vcmask 458112
    %64 = vst.msk [vmem:[#allocation0] sm:$0x1] %vm63, %v62
    %s65 = scalar_lea.vmem %s0, 5
    %v66 = vld [vmem:[%s65] sm:$0x1]
    %67 = vrot.lane.b32.xlu0 %v66, 40
    %v68 = vpop.permute.xlu0 %67
    %vm69 = vcmask 392512
    %70 = vst.msk [vmem:[#allocation0] sm:$0x1] %vm69, %v68
    %s71 = scalar_lea.vmem %s0, 4
    %v72 = vld [vmem:[%s71] sm:$0x1]
    %73 = vrot.lane.b32.xlu0 %v72, 32
    %v74 = vpop.permute.xlu0 %73
    %vm75 = vcmask 326912
    %76 = vst.msk [vmem:[#allocation0] sm:$0x1] %vm75, %v74
    %s77 = scalar_lea.vmem %s0, 3
    %v78 = vld [vmem:[%s77] sm:$0x1]
    %79 = vrot.lane.b32.xlu0 %v78, 24
    %v80 = vpop.permute.xlu0 %79
    %vm81 = vcmask 261312
    %82 = vst.msk [vmem:[#allocation0] sm:$0x1] %vm81, %v80
    %s83 = scalar_lea.vmem %s0, 2
    %v84 = vld [vmem:[%s83] sm:$0x1]
    %85 = vrot.lane.b32.xlu0 %v84, 16
    %v86 = vpop.permute.xlu0 %85
    %vm87 = vcmask 195712
    %88 = vst.msk [vmem:[#allocation0] sm:$0x1] %vm87, %v86
    %s89 = scalar_lea.vmem %s0, 1
    %v90 = vld [vmem:[%s89] sm:$0x1]
    %91 = vrot.lane.b32.xlu0 %v90, 8
    %v92 = vpop.permute.xlu0 %91
    %vm93 = vcmask 130112
    %94 = vst.msk [vmem:[#allocation0] sm:$0x1] %vm93, %v92
    %s96 = sshllo.u32 0, 1
    %v98 = vld [vmem:[#allocation0] sm:%s96]
    %s99 = sshllo.u32 0, 1
    %100 = vst [vmem:[%s1] sm:%s99] %v98

// kernel: conv_block_forward.3
$region0: #{conv_block_forward.3}
  #allocation0 [shape = 'u32[]', space=smem, size = 0x4, offset = 0x4, fixed_abs, tag = 'smem constant byte address 0x4 - core index']
  #allocation1 [shape = 'u32[144,128]{1,0:T(1,128)}', space=vmem, size = 0x12000, scoped, tag = 'internal scratch']
  #allocation2 [shape = 'f32[2,18,64]{2,1,0:T(8,128)}', space=vmem, size = 0x6000, scoped, tag = 'scratch operand']
  %s0 = inlined_call_operand.vmem [shape: f32[2,16,64], index: 0, kind: input, shape index: {}]
  %s1 = inlined_call_operand.vmem [shape: f32[3,64,128], index: 1, kind: input, shape index: {}]
  %s2 = inlined_call_operand.vmem [shape: bf16[2,16,128], index: 2, kind: output, shape index: {0}]
  %s3 = inlined_call_operand.vmem [shape: f32[1,1,128], index: 3, kind: output, shape index: {1}]
  %s4 = inlined_call_operand.vmem [shape: f32[1,1,128], index: 4, kind: output, shape index: {2}]
  %5 = xla_tuple %s2, %s3, %s4
  %s6 = sld [smem:[#allocation0]]
  $region34: #{conv_block_forward.3} parent=0
    _
  %s8 = ssub.s32 1, %s6
  %s9 = scalar_select 0, %s8, %s6
  // Predicated region
  $region2: #{conv_block_forward.3} parent=0 // pred_check
    _
  $region3: #{conv_block_forward.3} parent=0 // pred_check_branch
    %11 = sbr.rel (0) target = $region5
  $region4: #{conv_block_forward.3} parent=0 // pred_region
    _
  $region5: #{conv_block_forward.3} parent=0 // pred_fallthru
    _
  // Predicated region
  $region6: #{conv_block_forward.3} parent=0 // pred_check
    _
  $region7: #{conv_block_forward.3} parent=0 // pred_check_branch
    %13 = sbr.rel (0) target = $region9
  $region8: #{conv_block_forward.3} parent=0 // pred_region
    _
  $region9: #{conv_block_forward.3} parent=0 // pred_fallthru
    _
  %v14 = vld [vmem:[%s0] sm:$0xff]
  %v15 = vld [vmem:[%s0 + $0x8] sm:$0xff]
  %v16 = vld [vmem:[%s0 + $0x10] sm:$0xff]
  %v17 = vld [vmem:[%s0 + $0x18] sm:$0xff]
  %vm18 = vcmask 516096
  %19 = vst.msk [vmem:[#allocation2] sm:$0x1] %vm18, 0.0
  %20 = vst.msk [vmem:[#allocation2 + $0x18] sm:$0x1] %vm18, 0.0
  %21 = vst.msk [vmem:[#allocation2 + $0x11] sm:$0x1] %vm18, 0.0
  %22 = vst.msk [vmem:[#allocation2 + $0x29] sm:$0x1] %vm18, 0.0
  %vm23 = vcmask 523264
  %24 = vst.msk [vmem:[#allocation2 + $0x1] sm:$0xff] %vm23, %v14
  %25 = vst.msk [vmem:[#allocation2 + $0x9] sm:$0xff] %vm23, %v15
  %26 = vst.msk [vmem:[#allocation2 + $0x19] sm:$0xff] %vm23, %v16
  %27 = vst.msk [vmem:[#allocation2 + $0x21] sm:$0xff] %vm23, %v17
  %v28 = vld [vmem:[#allocation2] sm:$0xff]
  %v29 = vld [vmem:[#allocation2 + $0x8] sm:$0xff]
  %v30 = vld [vmem:[#allocation2 + $0x18] sm:$0xff]
  %v31 = vld [vmem:[#allocation2 + $0x20] sm:$0xff]
  %v32 = vld [vmem:[%s1] sm:$0xff]
  %v33 = vld [vmem:[%s1 + $0x8] sm:$0xff]
  %v34 = vld [vmem:[%s1 + $0x10] sm:$0xff]
  %v35 = vld [vmem:[%s1 + $0x18] sm:$0xff]
  %v36 = vld [vmem:[%s1 + $0x20] sm:$0xff]
  %v37 = vld [vmem:[%s1 + $0x28] sm:$0xff]
  %v38 = vld [vmem:[%s1 + $0x30] sm:$0xff]
  %v39 = vld [vmem:[%s1 + $0x38] sm:$0xff]
  %v40 = vld [vmem:[#allocation2 + $0x1] sm:$0xff]
  %v41 = vld [vmem:[#allocation2 + $0x9] sm:$0xff]
  %v42 = vld [vmem:[#allocation2 + $0x19] sm:$0xff]
  %v43 = vld [vmem:[#allocation2 + $0x21] sm:$0xff]
  %s44 = scalar_lea.vmem %s1, 64
  %v45 = vld [vmem:[%s44] sm:$0xff]
  %v46 = vld [vmem:[%s44 + $0x8] sm:$0xff]
  %v47 = vld [vmem:[%s44 + $0x10] sm:$0xff]
  %v48 = vld [vmem:[%s44 + $0x18] sm:$0xff]
  %v49 = vld [vmem:[%s44 + $0x20] sm:$0xff]
  %v50 = vld [vmem:[%s44 + $0x28] sm:$0xff]
  %v51 = vld [vmem:[%s44 + $0x30] sm:$0xff]
  %v52 = vld [vmem:[%s44 + $0x38] sm:$0xff]
  %v54 = vsel %vm23, %v40, 0
  %v57 = vsel %vm23, %v41, 0
  %v60 = vsel %vm23, %v42, 0
  %v63 = vsel %vm23, %v43, 0
  %65 = vmatprep.subr.mxu0 0.0
  %66 = vmatpush1.msra.mxu0 %v45
  %67 = vmatprep.subr.mxu0 0.0
  %68 = vmatpush1.msra.mxu0 %v46
  %69 = vmatprep.subr.mxu0 0.0
  %70 = vmatpush1.msra.mxu0 %v47
  %71 = vmatprep.subr.mxu0 0.0
  %72 = vmatpush1.msra.mxu0 %v48
  %73 = vmatprep.subr.mxu0 0.0
  %74 = vmatpush1.msra.mxu0 %v49
  %75 = vmatprep.subr.mxu0 0.0
  %76 = vmatpush1.msra.mxu0 %v50
  %77 = vmatprep.subr.mxu0 0.0
  %78 = vmatpush1.msra.mxu0 %v51
  %79 = vmatprep.subr.mxu0 0.0
  %80 = vmatpush1.msra.mxu0 %v52
  %81 = vmatprep.subr.mxu0 0.0
  %82 = vmatpush1.msra.mxu0 0.0
  %83 = vmatprep.subr.mxu0 0.0
  %84 = vmatpush1.msra.mxu0 0.0
  %85 = vmatprep.subr.mxu0 0.0
  %86 = vmatpush1.msra.mxu0 0.0
  %87 = vmatprep.subr.mxu0 0.0
  %88 = vmatpush1.msra.mxu0 0.0
  %89 = vmatprep.subr.mxu0 0.0
  %90 = vmatpush1.msra.mxu0 0.0
  %91 = vmatprep.subr.mxu0 0.0
  %92 = vmatpush1.msra.mxu0 0.0
  %93 = vmatprep.subr.mxu0 0.0
  %94 = vmatpush1.msra.mxu0 0.0
  %95 = vmatprep.subr.mxu0 0.0
  %96 = vmatpush1.msra.mxu0 0.0
  %97 = vmatprep.subr.mxu0 0.0
  %98 = vmatpush1.msra.mxu0 0.0
  %99 = vmatprep.subr.mxu0 0.0
  %100 = vmatpush1.msra.mxu0 0.0
  %101 = vmatprep.subr.mxu0 0.0
  %102 = vmatpush1.msra.mxu0 0.0
  %103 = vmatprep.subr.mxu0 0.0
  %104 = vmatpush1.msra.mxu0 0.0
  %105 = vmatprep.subr.mxu0 0.0
  %106 = vmatpush1.msra.mxu0 0.0
  %107 = vmatprep.subr.mxu0 0.0
  %108 = vmatpush1.msra.mxu0 0.0
  %109 = vmatprep.subr.mxu0 0.0
  %110 = vmatpush1.msra.mxu0 0.0
  %111 = vmatprep.subr.mxu0 0.0
  %112 = vmatpush1.msra.mxu0 0.0
  %113 = vmatprep.subr.mxu0 0.0
  %114 = vmatpush1.msra.mxu0 0.0
  %115 = vmatprep.subr.mxu0 0.0
  %116 = vmatpush1.msra.mxu0 0.0
  %117 = vmatprep.subr.mxu0 0.0
  %118 = vmatpush1.msra.mxu0 0.0
  %119 = vmatprep.subr.mxu0 0.0
  %120 = vmatpush1.msra.mxu0 0.0
  %121 = vmatprep.subr.mxu0 0.0
  %122 = vmatpush1.msra.mxu0 0.0
  %123 = vmatprep.subr.mxu0 0.0
  %124 = vmatpush1.msra.mxu0 0.0
  %125 = vmatprep.subr.mxu0 0.0
  %126 = vmatpush1.msra.mxu0 0.0
  %127 = vmatprep.subr.mxu0 0.0
  %128 = vmatpush1.msra.mxu0 0.0
  %129 = vmatprep.mubr.f32.mxu0 0.0
  %130 = vmatmul.mubr.f32.gmra.mrb[0].mxu0 %v54
  %v131 = vpop.f32.mrb[0].mxu0
  %v132 = vadd.f32 0.0, %v131
  %v133 = vpop.f32.mrb[0].mxu0
  %134 = vmatprep.mubr.f32.mxu0 0.0
  %135 = vmatmul.mubr.f32.gmra.mrb[0].mxu0 %v57
  %v136 = vpop.f32.mrb[0].mxu0
  %v137 = vadd.f32 0.0, %v136
  %v138 = vpop.f32.mrb[0].mxu0
  %139 = vmatprep.mubr.f32.mxu0 0.0
  %140 = vmatmul.mubr.f32.gmra.mrb[0].mxu0 %v60
  %v141 = vpop.f32.mrb[0].mxu0
  %v142 = vadd.f32 0.0, %v141
  %v143 = vpop.f32.mrb[0].mxu0
  %144 = vmatprep.mubr.f32.mxu0 0.0
  %145 = vmatmul.mubr.f32.gmra.mrb[0].mxu0 %v63
  %v146 = vpop.f32.mrb[0].mxu0
  %v147 = vadd.f32 0.0, %v146
  %v148 = vpop.f32.mrb[0].mxu0
  %149 = vdwg.mxu0
  %v151 = vsel %vm23, %v28, 0
  %v154 = vsel %vm23, %v29, 0
  %v157 = vsel %vm23, %v30, 0
  %v160 = vsel %vm23, %v31, 0
  %162 = vmatprep.subr.mxu0 0.0
  %163 = vmatpush1.msra.mxu0 %v32
  %164 = vmatprep.subr.mxu0 0.0
  %165 = vmatpush1.msra.mxu0 %v33
  %166 = vmatprep.subr.mxu0 0.0
  %167 = vmatpush1.msra.mxu0 %v34
  %168 = vmatprep.subr.mxu0 0.0
  %169 = vmatpush1.msra.mxu0 %v35
  %170 = vmatprep.subr.mxu0 0.0
  %171 = vmatpush1.msra.mxu0 %v36
  %172 = vmatprep.subr.mxu0 0.0
  %173 = vmatpush1.msra.mxu0 %v37
  %174 = vmatprep.subr.mxu0 0.0
  %175 = vmatpush1.msra.mxu0 %v38
  %176 = vmatprep.subr.mxu0 0.0
  %177 = vmatpush1.msra.mxu0 %v39
  %178 = vmatprep.subr.mxu0 0.0
  %179 = vmatpush1.msra.mxu0 0.0
  %180 = vmatprep.subr.mxu0 0.0
  %181 = vmatpush1.msra.mxu0 0.0
  %182 = vmatprep.subr.mxu0 0.0
  %183 = vmatpush1.msra.mxu0 0.0
  %184 = vmatprep.subr.mxu0 0.0
  %185 = vmatpush1.msra.mxu0 0.0
  %186 = vmatprep.subr.mxu0 0.0
  %187 = vmatpush1.msra.mxu0 0.0
  %188 = vmatprep.subr.mxu0 0.0
  %189 = vmatpush1.msra.mxu0 0.0
  %190 = vmatprep.subr.mxu0 0.0
  %191 = vmatpush1.msra.mxu0 0.0
  %192 = vmatprep.subr.mxu0 0.0
  %193 = vmatpush1.msra.mxu0 0.0
  %194 = vmatprep.subr.mxu0 0.0
  %195 = vmatpush1.msra.mxu0 0.0
  %196 = vmatprep.subr.mxu0 0.0
  %197 = vmatpush1.msra.mxu0 0.0
  %198 = vmatprep.subr.mxu0 0.0
  %199 = vmatpush1.msra.mxu0 0.0
  %200 = vmatprep.subr.mxu0 0.0
  %201 = vmatpush1.msra.mxu0 0.0
  %202 = vmatprep.subr.mxu0 0.0
  %203 = vmatpush1.msra.mxu0 0.0
  %204 = vmatprep.subr.mxu0 0.0
  %205 = vmatpush1.msra.mxu0 0.0
  %206 = vmatprep.subr.mxu0 0.0
  %207 = vmatpush1.msra.mxu0 0.0
  %208 = vmatprep.subr.mxu0 0.0
  %209 = vmatpush1.msra.mxu0 0.0
  %210 = vmatprep.subr.mxu0 0.0
  %211 = vmatpush1.msra.mxu0 0.0
  %212 = vmatprep.subr.mxu0 0.0
  %213 = vmatpush1.msra.mxu0 0.0
  %214 = vmatprep.subr.mxu0 0.0
  %215 = vmatpush1.msra.mxu0 0.0
  %216 = vmatprep.subr.mxu0 0.0
  %217 = vmatpush1.msra.mxu0 0.0
  %218 = vmatprep.subr.mxu0 0.0
  %219 = vmatpush1.msra.mxu0 0.0
  %220 = vmatprep.subr.mxu0 0.0
  %221 = vmatpush1.msra.mxu0 0.0
  %222 = vmatprep.subr.mxu0 0.0
  %223 = vmatpush1.msra.mxu0 0.0
  %224 = vmatprep.subr.mxu0 0.0
  %225 = vmatpush1.msra.mxu0 0.0
  %226 = vmatprep.mubr.f32.mxu0 0.0
  %227 = vmatmul.mubr.f32.gmra.mrb[0].mxu0 %v151
  %v228 = vpop.f32.mrb[0].mxu0
  %v229 = vadd.f32 %v132, %v228
  %v230 = vpop.f32.mrb[0].mxu0
  %231 = vmatprep.mubr.f32.mxu0 0.0
  %232 = vmatmul.mubr.f32.gmra.mrb[0].mxu0 %v154
  %v233 = vpop.f32.mrb[0].mxu0
  %v234 = vadd.f32 %v137, %v233
  %v235 = vpop.f32.mrb[0].mxu0
  %236 = vmatprep.mubr.f32.mxu0 0.0
  %237 = vmatmul.mubr.f32.gmra.mrb[0].mxu0 %v157
  %v238 = vpop.f32.mrb[0].mxu0
  %v239 = vadd.f32 %v142, %v238
  %v240 = vpop.f32.mrb[0].mxu0
  %241 = vmatprep.mubr.f32.mxu0 0.0
  %242 = vmatmul.mubr.f32.gmra.mrb[0].mxu0 %v160
  %v243 = vpop.f32.mrb[0].mxu0
  %v244 = vadd.f32 %v147, %v243
  %v245 = vpop.f32.mrb[0].mxu0
  %246 = vdwg.mxu0
  %v247 = vld [vmem:[#allocation2 + $0x2] sm:$0xff]
  %v248 = vld [vmem:[#allocation2 + $0xa] sm:$0xff]
  %v249 = vld [vmem:[#allocation2 + $0x1a] sm:$0xff]
  %v250 = vld [vmem:[#allocation2 + $0x22] sm:$0xff]
  %s251 = scalar_lea.vmem %s1, 128
  %v252 = vld [vmem:[%s251] sm:$0xff]
  %v253 = vld [vmem:[%s251 + $0x8] sm:$0xff]
  %v254 = vld [vmem:[%s251 + $0x10] sm:$0xff]
  %v255 = vld [vmem:[%s251 + $0x18] sm:$0xff]
  %v256 = vld [vmem:[%s251 + $0x20] sm:$0xff]
  %v257 = vld [vmem:[%s251 + $0x28] sm:$0xff]
  %v258 = vld [vmem:[%s251 + $0x30] sm:$0xff]
  %v259 = vld [vmem:[%s251 + $0x38] sm:$0xff]
  %v261 = vsel %vm23, %v247, 0
  %v264 = vsel %vm23, %v248, 0
  %v267 = vsel %vm23, %v249, 0
  %v270 = vsel %vm23, %v250, 0
  %272 = vmatprep.subr.mxu0 0.0
  %273 = vmatpush1.msra.mxu0 %v252
  %274 = vmatprep.subr.mxu0 0.0
  %275 = vmatpush1.msra.mxu0 %v253
  %276 = vmatprep.subr.mxu0 0.0
  %277 = vmatpush1.msra.mxu0 %v254
  %278 = vmatprep.subr.mxu0 0.0
  %279 = vmatpush1.msra.mxu0 %v255
  %280 = vmatprep.subr.mxu0 0.0
  %281 = vmatpush1.msra.mxu0 %v256
  %282 = vmatprep.subr.mxu0 0.0
  %283 = vmatpush1.msra.mxu0 %v257
  %284 = vmatprep.subr.mxu0 0.0
  %285 = vmatpush1.msra.mxu0 %v258
  %286 = vmatprep.subr.mxu0 0.0
  %287 = vmatpush1.msra.mxu0 %v259
  %288 = vmatprep.subr.mxu0 0.0
  %289 = vmatpush1.msra.mxu0 0.0
  %290 = vmatprep.subr.mxu0 0.0
  %291 = vmatpush1.msra.mxu0 0.0
  %292 = vmatprep.subr.mxu0 0.0
  %293 = vmatpush1.msra.mxu0 0.0
  %294 = vmatprep.subr.mxu0 0.0
  %295 = vmatpush1.msra.mxu0 0.0
  %296 = vmatprep.subr.mxu0 0.0
  %297 = vmatpush1.msra.mxu0 0.0
  %298 = vmatprep.subr.mxu0 0.0
  %299 = vmatpush1.msra.mxu0 0.0
  %300 = vmatprep.subr.mxu0 0.0
  %301 = vmatpush1.msra.mxu0 0.0
  %302 = vmatprep.subr.mxu0 0.0
  %303 = vmatpush1.msra.mxu0 0.0
  %304 = vmatprep.subr.mxu0 0.0
  %305 = vmatpush1.msra.mxu0 0.0
  %306 = vmatprep.subr.mxu0 0.0
  %307 = vmatpush1.msra.mxu0 0.0
  %308 = vmatprep.subr.mxu0 0.0
  %309 = vmatpush1.msra.mxu0 0.0
  %310 = vmatprep.subr.mxu0 0.0
  %311 = vmatpush1.msra.mxu0 0.0
  %312 = vmatprep.subr.mxu0 0.0
  %313 = vmatpush1.msra.mxu0 0.0
  %314 = vmatprep.subr.mxu0 0.0
  %315 = vmatpush1.msra.mxu0 0.0
  %316 = vmatprep.subr.mxu0 0.0
  %317 = vmatpush1.msra.mxu0 0.0
  %318 = vmatprep.subr.mxu0 0.0
  %319 = vmatpush1.msra.mxu0 0.0
  %320 = vmatprep.subr.mxu0 0.0
  %321 = vmatpush1.msra.mxu0 0.0
  %322 = vmatprep.subr.mxu0 0.0
  %323 = vmatpush1.msra.mxu0 0.0
  %324 = vmatprep.subr.mxu0 0.0
  %325 = vmatpush1.msra.mxu0 0.0
  %326 = vmatprep.subr.mxu0 0.0
  %327 = vmatpush1.msra.mxu0 0.0
  %328 = vmatprep.subr.mxu0 0.0
  %329 = vmatpush1.msra.mxu0 0.0
  %330 = vmatprep.subr.mxu0 0.0
  %331 = vmatpush1.msra.mxu0 0.0
  %332 = vmatprep.subr.mxu0 0.0
  %333 = vmatpush1.msra.mxu0 0.0
  %334 = vmatprep.subr.mxu0 0.0
  %335 = vmatpush1.msra.mxu0 0.0
  %336 = vmatprep.mubr.f32.mxu0 0.0
  %337 = vmatmul.mubr.f32.gmra.mrb[0].mxu0 %v261
  %v338 = vpop.f32.mrb[0].mxu0
  %v339 = vadd.f32 0.0, %v338
  %v340 = vpop.f32.mrb[0].mxu0
  %341 = vmatprep.mubr.f32.mxu0 0.0
  %342 = vmatmul.mubr.f32.gmra.mrb[0].mxu0 %v264
  %v343 = vpop.f32.mrb[0].mxu0
  %v344 = vadd.f32 0.0, %v343
  %v345 = vpop.f32.mrb[0].mxu0
  %346 = vmatprep.mubr.f32.mxu0 0.0
  %347 = vmatmul.mubr.f32.gmra.mrb[0].mxu0 %v267
  %v348 = vpop.f32.mrb[0].mxu0
  %v349 = vadd.f32 0.0, %v348
  %v350 = vpop.f32.mrb[0].mxu0
  %351 = vmatprep.mubr.f32.mxu0 0.0
  %352 = vmatmul.mubr.f32.gmra.mrb[0].mxu0 %v270
  %v353 = vpop.f32.mrb[0].mxu0
  %v354 = vadd.f32 0.0, %v353
  %v355 = vpop.f32.mrb[0].mxu0
  %356 = vdwg.mxu0
  %v357 = vadd.f32 %v229, %v339
  %v358 = vadd.f32 %v234, %v344
  %v359 = vadd.f32 %v239, %v349
  %v360 = vadd.f32 %v244, %v354
  %v361 = vpack.c.bf16 %v358, %v357
  %v362 = vpack.c.bf16 %v360, %v359
  %v365 = vunpack.c.l.b16 %v361
  %v366 = vunpack.c.h.b16 %v361
  %v367 = vunpack.c.l.b16 %v362
  %v368 = vunpack.c.h.b16 %v362
  %v369 = vpack.c.b16 %v365, %v365
  %v370 = vpack.c.b16 %v366, %v366
  %v371 = vpack.c.b16 %v367, %v367
  %v372 = vpack.c.b16 %v368, %v368
  %377 = vst [vmem:[%s2] sm:$0xf] %v369
  %378 = vst [vmem:[%s2 + $0x4] sm:$0xf] %v370
  %379 = vst [vmem:[%s2 + $0x8] sm:$0xf] %v371
  %380 = vst [vmem:[%s2 + $0xc] sm:$0xf] %v372
  %v381 = vadd.f32 %v357, %v358
  %v382 = vadd.f32 %v381, %v359
  %v383 = vadd.f32 %v382, %v360
  %v384 = vrot.slane %v383, 4
  %v385 = vadd.f32 %v383, %v384
  %v386 = vrot.slane %v385, 2
  %v387 = vadd.f32 %v385, %v386
  %v388 = vrot.slane %v387, 1
  %v389 = vadd.f32 %v387, %v388
  %390 = vst [vmem:[%s3] sm:$0x1] %v389
  %v391 = vmul.f32 %v357, %v357
  %v392 = vmul.f32 %v358, %v358
  %v393 = vmul.f32 %v359, %v359
  %v394 = vmul.f32 %v360, %v360
  %v395 = vadd.f32 %v391, %v392
  %v396 = vadd.f32 %v395, %v393
  %v397 = vadd.f32 %v396, %v394
  %v398 = vrot.slane %v397, 4
  %v399 = vadd.f32 %v397, %v398
  %v400 = vrot.slane %v399, 2
  %v401 = vadd.f32 %v399, %v400
  %v402 = vrot.slane %v401, 1
  %v403 = vadd.f32 %v401, %v402
  %404 = vst [vmem:[%s4] sm:$0x1] %v403
  // Predicated region
  $region10: #{conv_block_forward.3} parent=0 // pred_check
    _
  $region11: #{conv_block_forward.3} parent=0 // pred_check_branch
    %406 = sbr.rel (0) target = $region13
  $region12: #{conv_block_forward.3} parent=0 // pred_region
    _
  $region13: #{conv_block_forward.3} parent=0 // pred_fallthru
    _
  // Predicated region
  $region14: #{conv_block_forward.3} parent=0 // pred_check
    _
  $region15: #{conv_block_forward.3} parent=0 // pred_check_branch
    %408 = sbr.rel (0) target = $region17
  $region16: #{conv_block_forward.3} parent=0 // pred_region
    _
  $region17: #{conv_block_forward.3} parent=0 // pred_fallthru
    _
  // Predicated region
  $region18: #{conv_block_forward.3} parent=0 // pred_check
    _
  $region19: #{conv_block_forward.3} parent=0 // pred_check_branch
    %410 = sbr.rel (0) target = $region21
  $region20: #{conv_block_forward.3} parent=0 // pred_region
    _
  $region21: #{conv_block_forward.3} parent=0 // pred_fallthru
    _
  // Predicated region
  $region22: #{conv_block_forward.3} parent=0 // pred_check
    _
  $region23: #{conv_block_forward.3} parent=0 // pred_check_branch
    %412 = sbr.rel (0) target = $region25
  $region24: #{conv_block_forward.3} parent=0 // pred_region
    _
  $region25: #{conv_block_forward.3} parent=0 // pred_fallthru
    _
  // Predicated region
  $region26: #{conv_block_forward.3} parent=0 // pred_check
    _
  $region27: #{conv_block_forward.3} parent=0 // pred_check_branch
    %414 = sbr.rel (0) target = $region29
  $region28: #{conv_block_forward.3} parent=0 // pred_region
    _
  $region29: #{conv_block_forward.3} parent=0 // pred_fallthru
    _
  // Predicated region
  $region30: #{conv_block_forward.3} parent=0 // pred_check
    _
  $region31: #{conv_block_forward.3} parent=0 // pred_check_branch
    %416 = sbr.rel (0) target = $region33
  $region32: #{conv_block_forward.3} parent=0 // pred_region
    _
  $region33: #{conv_block_forward.3} parent=0 // pred_fallthru
    _

// kernel: conv_block_forward.4
$region0: #{conv_block_forward.4}
  #allocation0 [shape = 'u32[]', space=smem, size = 0x4, offset = 0x4, fixed_abs, tag = 'smem constant byte address 0x4 - core index']
  #allocation1 [shape = 'u32[144,128]{1,0:T(1,128)}', space=vmem, size = 0x12000, scoped, tag = 'internal scratch']
  #allocation2 [shape = 'f32[2,18,128]{2,1,0:T(8,128)}', space=vmem, size = 0x6000, scoped, tag = 'scratch operand']
  %s0 = inlined_call_operand.vmem [shape: bf16[2,16,128], index: 0, kind: input, shape index: {}]
  %s1 = inlined_call_operand.vmem [shape: f32[1,128], index: 1, kind: input, shape index: {}]
  %s2 = inlined_call_operand.vmem [shape: f32[1,128], index: 2, kind: input, shape index: {}]
  %s3 = inlined_call_operand.vmem [shape: f32[3,128,128], index: 3, kind: input, shape index: {}]
  %s4 = inlined_call_operand.vmem [shape: bf16[2,16,128], index: 4, kind: output, shape index: {0}]
  %s5 = inlined_call_operand.vmem [shape: f32[1,1,128], index: 5, kind: output, shape index: {1}]
  %s6 = inlined_call_operand.vmem [shape: f32[1,1,128], index: 6, kind: output, shape index: {2}]
  %7 = xla_tuple %s4, %s5, %s6
  %s8 = sld [smem:[#allocation0]]
  $region42: #{conv_block_forward.4} parent=0
    _
  %s10 = ssub.s32 1, %s8
  %s11 = scalar_select 0, %s10, %s8
  // Predicated region
  $region2: #{conv_block_forward.4} parent=0 // pred_check
    _
  $region3: #{conv_block_forward.4} parent=0 // pred_check_branch
    %13 = sbr.rel (0) target = $region5
  $region4: #{conv_block_forward.4} parent=0 // pred_region
    _
  $region5: #{conv_block_forward.4} parent=0 // pred_fallthru
    _
  // Predicated region
  $region6: #{conv_block_forward.4} parent=0 // pred_check
    _
  $region7: #{conv_block_forward.4} parent=0 // pred_check_branch
    %15 = sbr.rel (0) target = $region9
  $region8: #{conv_block_forward.4} parent=0 // pred_region
    _
  $region9: #{conv_block_forward.4} parent=0 // pred_fallthru
    _
  // Predicated region
  $region10: #{conv_block_forward.4} parent=0 // pred_check
    _
  $region11: #{conv_block_forward.4} parent=0 // pred_check_branch
    %17 = sbr.rel (0) target = $region13
  $region12: #{conv_block_forward.4} parent=0 // pred_region
    _
  $region13: #{conv_block_forward.4} parent=0 // pred_fallthru
    _
  // Predicated region
  $region14: #{conv_block_forward.4} parent=0 // pred_check
    _
  $region15: #{conv_block_forward.4} parent=0 // pred_check_branch
    %19 = sbr.rel (0) target = $region17
  $region16: #{conv_block_forward.4} parent=0 // pred_region
    _
  $region17: #{conv_block_forward.4} parent=0 // pred_fallthru
    _
  %v20 = vld [vmem:[%s1] sm:$0x1]
  %v21 = vld [vmem:[%s2] sm:$0x1]
  %v22 = vld [vmem:[%s0] sm:$0xf]
  %v23 = vld [vmem:[%s0 + $0x4] sm:$0xf]
  %v24 = vld [vmem:[%s0 + $0x8] sm:$0xf]
  %v25 = vld [vmem:[%s0 + $0xc] sm:$0xf]
  %v26 = vunpack.c.l.bf16 %v22
  %v27 = vunpack.c.l.bf16 %v23
  %v28 = vunpack.c.l.bf16 %v24
  %v29 = vunpack.c.l.bf16 %v25
  %v31 = vlaneseq
  %v32 = vshrl.u32 %v31, 7
  %v33 = vsub.s32 0, %v32
  %v34 = vrot.slane %v20, %v33
  %v36 = vmul.f32 %v26, %v34
  %v37 = vmul.f32 %v27, %v34
  %v38 = vmul.f32 %v28, %v34
  %v39 = vmul.f32 %v29, %v34
  %v41 = vlaneseq
  %v42 = vshrl.u32 %v41, 7
  %v43 = vsub.s32 0, %v42
  %v44 = vrot.slane %v21, %v43
  %v46 = vadd.f32 %v36, %v44
  %v47 = vadd.f32 %v37, %v44
  %v48 = vadd.f32 %v38, %v44
  %v49 = vadd.f32 %v39, %v44
  %v50 = vmax.f32 %v46, 0.0
  %v51 = vmax.f32 %v47, 0.0
  %v52 = vmax.f32 %v48, 0.0
  %v53 = vmax.f32 %v49, 0.0
  %54 = vst [vmem:[#allocation2] sm:$0x1] 0.0
  %55 = vst [vmem:[#allocation2 + $0x18] sm:$0x1] 0.0
  %56 = vst [vmem:[#allocation2 + $0x11] sm:$0x1] 0.0
  %57 = vst [vmem:[#allocation2 + $0x29] sm:$0x1] 0.0
  %58 = vst [vmem:[#allocation2 + $0x1] sm:$0xff] %v50
  %59 = vst [vmem:[#allocation2 + $0x9] sm:$0xff] %v51
  %60 = vst [vmem:[#allocation2 + $0x19] sm:$0xff] %v52
  %61 = vst [vmem:[#allocation2 + $0x21] sm:$0xff] %v53
  %v62 = vld [vmem:[#allocation2] sm:$0xff]
  %v63 = vld [vmem:[#allocation2 + $0x8] sm:$0xff]
  %v64 = vld [vmem:[#allocation2 + $0x18] sm:$0xff]
  %v65 = vld [vmem:[#allocation2 + $0x20] sm:$0xff]
  %v66 = vld [vmem:[%s3] sm:$0xff]
  %v67 = vld [vmem:[%s3 + $0x8] sm:$0xff]
  %v68 = vld [vmem:[%s3 + $0x10] sm:$0xff]
  %v69 = vld [vmem:[%s3 + $0x18] sm:$0xff]
  %v70 = vld [vmem:[%s3 + $0x20] sm:$0xff]
  %v71 = vld [vmem:[%s3 + $0x28] sm:$0xff]
  %v72 = vld [vmem:[%s3 + $0x30] sm:$0xff]
  %v73 = vld [vmem:[%s3 + $0x38] sm:$0xff]
  %v74 = vld [vmem:[%s3 + $0x40] sm:$0xff]
  %v75 = vld [vmem:[%s3 + $0x48] sm:$0xff]
  %v76 = vld [vmem:[%s3 + $0x50] sm:$0xff]
  %v77 = vld [vmem:[%s3 + $0x58] sm:$0xff]
  %v78 = vld [vmem:[%s3 + $0x60] sm:$0xff]
  %v79 = vld [vmem:[%s3 + $0x68] sm:$0xff]
  %v80 = vld [vmem:[%s3 + $0x70] sm:$0xff]
  %v81 = vld [vmem:[%s3 + $0x78] sm:$0xff]
  %v82 = vld [vmem:[#allocation2 + $0x1] sm:$0xff]
  %v83 = vld [vmem:[#allocation2 + $0x9] sm:$0xff]
  %v84 = vld [vmem:[#allocation2 + $0x19] sm:$0xff]
  %v85 = vld [vmem:[#allocation2 + $0x21] sm:$0xff]
  %s86 = scalar_lea.vmem %s3, 128
  %v87 = vld [vmem:[%s86] sm:$0xff]
  %v88 = vld [vmem:[%s86 + $0x8] sm:$0xff]
  %v89 = vld [vmem:[%s86 + $0x10] sm:$0xff]
  %v90 = vld [vmem:[%s86 + $0x18] sm:$0xff]
  %v91 = vld [vmem:[%s86 + $0x20] sm:$0xff]
  %v92 = vld [vmem:[%s86 + $0x28] sm:$0xff]
  %v93 = vld [vmem:[%s86 + $0x30] sm:$0xff]
  %v94 = vld [vmem:[%s86 + $0x38] sm:$0xff]
  %v95 = vld [vmem:[%s86 + $0x40] sm:$0xff]
  %v96 = vld [vmem:[%s86 + $0x48] sm:$0xff]
  %v97 = vld [vmem:[%s86 + $0x50] sm:$0xff]
  %v98 = vld [vmem:[%s86 + $0x58] sm:$0xff]
  %v99 = vld [vmem:[%s86 + $0x60] sm:$0xff]
  %v100 = vld [vmem:[%s86 + $0x68] sm:$0xff]
  %v101 = vld [vmem:[%s86 + $0x70] sm:$0xff]
  %v102 = vld [vmem:[%s86 + $0x78] sm:$0xff]
  %103 = vmatprep.subr.mxu0 0.0
  %104 = vmatpush1.msra.mxu0 %v87
  %105 = vmatprep.subr.mxu0 0.0
  %106 = vmatpush1.msra.mxu0 %v88
  %107 = vmatprep.subr.mxu0 0.0
  %108 = vmatpush1.msra.mxu0 %v89
  %109 = vmatprep.subr.mxu0 0.0
  %110 = vmatpush1.msra.mxu0 %v90
  %111 = vmatprep.subr.mxu0 0.0
  %112 = vmatpush1.msra.mxu0 %v91
  %113 = vmatprep.subr.mxu0 0.0
  %114 = vmatpush1.msra.mxu0 %v92
  %115 = vmatprep.subr.mxu0 0.0
  %116 = vmatpush1.msra.mxu0 %v93
  %117 = vmatprep.subr.mxu0 0.0
  %118 = vmatpush1.msra.mxu0 %v94
  %119 = vmatprep.subr.mxu0 0.0
  %120 = vmatpush1.msra.mxu0 %v95
  %121 = vmatprep.subr.mxu0 0.0
  %122 = vmatpush1.msra.mxu0 %v96
  %123 = vmatprep.subr.mxu0 0.0
  %124 = vmatpush1.msra.mxu0 %v97
  %125 = vmatprep.subr.mxu0 0.0
  %126 = vmatpush1.msra.mxu0 %v98
  %127 = vmatprep.subr.mxu0 0.0
  %128 = vmatpush1.msra.mxu0 %v99
  %129 = vmatprep.subr.mxu0 0.0
  %130 = vmatpush1.msra.mxu0 %v100
  %131 = vmatprep.subr.mxu0 0.0
  %132 = vmatpush1.msra.mxu0 %v101
  %133 = vmatprep.subr.mxu0 0.0
  %134 = vmatpush1.msra.mxu0 %v102
  %135 = vmatprep.subr.mxu0 0.0
  %136 = vmatpush1.msra.mxu0 0.0
  %137 = vmatprep.subr.mxu0 0.0
  %138 = vmatpush1.msra.mxu0 0.0
  %139 = vmatprep.subr.mxu0 0.0
  %140 = vmatpush1.msra.mxu0 0.0
  %141 = vmatprep.subr.mxu0 0.0
  %142 = vmatpush1.msra.mxu0 0.0
  %143 = vmatprep.subr.mxu0 0.0
  %144 = vmatpush1.msra.mxu0 0.0
  %145 = vmatprep.subr.mxu0 0.0
  %146 = vmatpush1.msra.mxu0 0.0
  %147 = vmatprep.subr.mxu0 0.0
  %148 = vmatpush1.msra.mxu0 0.0
  %149 = vmatprep.subr.mxu0 0.0
  %150 = vmatpush1.msra.mxu0 0.0
  %151 = vmatprep.subr.mxu0 0.0
  %152 = vmatpush1.msra.mxu0 0.0
  %153 = vmatprep.subr.mxu0 0.0
  %154 = vmatpush1.msra.mxu0 0.0
  %155 = vmatprep.subr.mxu0 0.0
  %156 = vmatpush1.msra.mxu0 0.0
  %157 = vmatprep.subr.mxu0 0.0
  %158 = vmatpush1.msra.mxu0 0.0
  %159 = vmatprep.subr.mxu0 0.0
  %160 = vmatpush1.msra.mxu0 0.0
  %161 = vmatprep.subr.mxu0 0.0
  %162 = vmatpush1.msra.mxu0 0.0
  %163 = vmatprep.subr.mxu0 0.0
  %164 = vmatpush1.msra.mxu0 0.0
  %165 = vmatprep.subr.mxu0 0.0
  %166 = vmatpush1.msra.mxu0 0.0
  %167 = vmatprep.mubr.f32.mxu0 0.0
  %168 = vmatmul.mubr.f32.gmra.mrb[0].mxu0 %v82
  %v169 = vpop.f32.mrb[0].mxu0
  %v170 = vadd.f32 0.0, %v169
  %v171 = vpop.f32.mrb[0].mxu0
  %172 = vmatprep.mubr.f32.mxu0 0.0
  %173 = vmatmul.mubr.f32.gmra.mrb[0].mxu0 %v83
  %v174 = vpop.f32.mrb[0].mxu0
  %v175 = vadd.f32 0.0, %v174
  %v176 = vpop.f32.mrb[0].mxu0
  %177 = vmatprep.mubr.f32.mxu0 0.0
  %178 = vmatmul.mubr.f32.gmra.mrb[0].mxu0 %v84
  %v179 = vpop.f32.mrb[0].mxu0
  %v180 = vadd.f32 0.0, %v179
  %v181 = vpop.f32.mrb[0].mxu0
  %182 = vmatprep.mubr.f32.mxu0 0.0
  %183 = vmatmul.mubr.f32.gmra.mrb[0].mxu0 %v85
  %v184 = vpop.f32.mrb[0].mxu0
  %v185 = vadd.f32 0.0, %v184
  %v186 = vpop.f32.mrb[0].mxu0
  %187 = vdwg.mxu0
  %188 = vmatprep.subr.mxu0 0.0
  %189 = vmatpush1.msra.mxu0 %v66
  %190 = vmatprep.subr.mxu0 0.0
  %191 = vmatpush1.msra.mxu0 %v67
  %192 = vmatprep.subr.mxu0 0.0
  %193 = vmatpush1.msra.mxu0 %v68
  %194 = vmatprep.subr.mxu0 0.0
  %195 = vmatpush1.msra.mxu0 %v69
  %196 = vmatprep.subr.mxu0 0.0
  %197 = vmatpush1.msra.mxu0 %v70
  %198 = vmatprep.subr.mxu0 0.0
  %199 = vmatpush1.msra.mxu0 %v71
  %200 = vmatprep.subr.mxu0 0.0
  %201 = vmatpush1.msra.mxu0 %v72
  %202 = vmatprep.subr.mxu0 0.0
  %203 = vmatpush1.msra.mxu0 %v73
  %204 = vmatprep.subr.mxu0 0.0
  %205 = vmatpush1.msra.mxu0 %v74
  %206 = vmatprep.subr.mxu0 0.0
  %207 = vmatpush1.msra.mxu0 %v75
  %208 = vmatprep.subr.mxu0 0.0
  %209 = vmatpush1.msra.mxu0 %v76
  %210 = vmatprep.subr.mxu0 0.0
  %211 = vmatpush1.msra.mxu0 %v77
  %212 = vmatprep.subr.mxu0 0.0
  %213 = vmatpush1.msra.mxu0 %v78
  %214 = vmatprep.subr.mxu0 0.0
  %215 = vmatpush1.msra.mxu0 %v79
  %216 = vmatprep.subr.mxu0 0.0
  %217 = vmatpush1.msra.mxu0 %v80
  %218 = vmatprep.subr.mxu0 0.0
  %219 = vmatpush1.msra.mxu0 %v81
  %220 = vmatprep.subr.mxu0 0.0
  %221 = vmatpush1.msra.mxu0 0.0
  %222 = vmatprep.subr.mxu0 0.0
  %223 = vmatpush1.msra.mxu0 0.0
  %224 = vmatprep.subr.mxu0 0.0
  %225 = vmatpush1.msra.mxu0 0.0
  %226 = vmatprep.subr.mxu0 0.0
  %227 = vmatpush1.msra.mxu0 0.0
  %228 = vmatprep.subr.mxu0 0.0
  %229 = vmatpush1.msra.mxu0 0.0
  %230 = vmatprep.subr.mxu0 0.0
  %231 = vmatpush1.msra.mxu0 0.0
  %232 = vmatprep.subr.mxu0 0.0
  %233 = vmatpush1.msra.mxu0 0.0
  %234 = vmatprep.subr.mxu0 0.0
  %235 = vmatpush1.msra.mxu0 0.0
  %236 = vmatprep.subr.mxu0 0.0
  %237 = vmatpush1.msra.mxu0 0.0
  %238 = vmatprep.subr.mxu0 0.0
  %239 = vmatpush1.msra.mxu0 0.0
  %240 = vmatprep.subr.mxu0 0.0
  %241 = vmatpush1.msra.mxu0 0.0
  %242 = vmatprep.subr.mxu0 0.0
  %243 = vmatpush1.msra.mxu0 0.0
  %244 = vmatprep.subr.mxu0 0.0
  %245 = vmatpush1.msra.mxu0 0.0
  %246 = vmatprep.subr.mxu0 0.0
  %247 = vmatpush1.msra.mxu0 0.0
  %248 = vmatprep.subr.mxu0 0.0
  %249 = vmatpush1.msra.mxu0 0.0
  %250 = vmatprep.subr.mxu0 0.0
  %251 = vmatpush1.msra.mxu0 0.0
  %252 = vmatprep.mubr.f32.mxu0 0.0
  %253 = vmatmul.mubr.f32.gmra.mrb[0].mxu0 %v62
  %v254 = vpop.f32.mrb[0].mxu0
  %v255 = vadd.f32 %v170, %v254
  %v256 = vpop.f32.mrb[0].mxu0
  %257 = vmatprep.mubr.f32.mxu0 0.0
  %258 = vmatmul.mubr.f32.gmra.mrb[0].mxu0 %v63
  %v259 = vpop.f32.mrb[0].mxu0
  %v260 = vadd.f32 %v175, %v259
  %v261 = vpop.f32.mrb[0].mxu0
  %262 = vmatprep.mubr.f32.mxu0 0.0
  %263 = vmatmul.mubr.f32.gmra.mrb[0].mxu0 %v64
  %v264 = vpop.f32.mrb[0].mxu0
  %v265 = vadd.f32 %v180, %v264
  %v266 = vpop.f32.mrb[0].mxu0
  %267 = vmatprep.mubr.f32.mxu0 0.0
  %268 = vmatmul.mubr.f32.gmra.mrb[0].mxu0 %v65
  %v269 = vpop.f32.mrb[0].mxu0
  %v270 = vadd.f32 %v185, %v269
  %v271 = vpop.f32.mrb[0].mxu0
  %272 = vdwg.mxu0
  %v273 = vld [vmem:[#allocation2 + $0x2] sm:$0xff]
  %v274 = vld [vmem:[#allocation2 + $0xa] sm:$0xff]
  %v275 = vld [vmem:[#allocation2 + $0x1a] sm:$0xff]
  %v276 = vld [vmem:[#allocation2 + $0x22] sm:$0xff]
  %s277 = scalar_lea.vmem %s3, 256
  %v278 = vld [vmem:[%s277] sm:$0xff]
  %v279 = vld [vmem:[%s277 + $0x8] sm:$0xff]
  %v280 = vld [vmem:[%s277 + $0x10] sm:$0xff]
  %v281 = vld [vmem:[%s277 + $0x18] sm:$0xff]
  %v282 = vld [vmem:[%s277 + $0x20] sm:$0xff]
  %v283 = vld [vmem:[%s277 + $0x28] sm:$0xff]
  %v284 = vld [vmem:[%s277 + $0x30] sm:$0xff]
  %v285 = vld [vmem:[%s277 + $0x38] sm:$0xff]
  %v286 = vld [vmem:[%s277 + $0x40] sm:$0xff]
  %v287 = vld [vmem:[%s277 + $0x48] sm:$0xff]
  %v288 = vld [vmem:[%s277 + $0x50] sm:$0xff]
  %v289 = vld [vmem:[%s277 + $0x58] sm:$0xff]
  %v290 = vld [vmem:[%s277 + $0x60] sm:$0xff]
  %v291 = vld [vmem:[%s277 + $0x68] sm:$0xff]
  %v292 = vld [vmem:[%s277 + $0x70] sm:$0xff]
  %v293 = vld [vmem:[%s277 + $0x78] sm:$0xff]
  %294 = vmatprep.subr.mxu0 0.0
  %295 = vmatpush1.msra.mxu0 %v278
  %296 = vmatprep.subr.mxu0 0.0
  %297 = vmatpush1.msra.mxu0 %v279
  %298 = vmatprep.subr.mxu0 0.0
  %299 = vmatpush1.msra.mxu0 %v280
  %300 = vmatprep.subr.mxu0 0.0
  %301 = vmatpush1.msra.mxu0 %v281
  %302 = vmatprep.subr.mxu0 0.0
  %303 = vmatpush1.msra.mxu0 %v282
  %304 = vmatprep.subr.mxu0 0.0
  %305 = vmatpush1.msra.mxu0 %v283
  %306 = vmatprep.subr.mxu0 0.0
  %307 = vmatpush1.msra.mxu0 %v284
  %308 = vmatprep.subr.mxu0 0.0
  %309 = vmatpush1.msra.mxu0 %v285
  %310 = vmatprep.subr.mxu0 0.0
  %311 = vmatpush1.msra.mxu0 %v286
  %312 = vmatprep.subr.mxu0 0.0
  %313 = vmatpush1.msra.mxu0 %v287
  %314 = vmatprep.subr.mxu0 0.0
  %315 = vmatpush1.msra.mxu0 %v288
  %316 = vmatprep.subr.mxu0 0.0
  %317 = vmatpush1.msra.mxu0 %v289
  %318 = vmatprep.subr.mxu0 0.0
  %319 = vmatpush1.msra.mxu0 %v290
  %320 = vmatprep.subr.mxu0 0.0
  %321 = vmatpush1.msra.mxu0 %v291
  %322 = vmatprep.subr.mxu0 0.0
  %323 = vmatpush1.msra.mxu0 %v292
  %324 = vmatprep.subr.mxu0 0.0
  %325 = vmatpush1.msra.mxu0 %v293
  %326 = vmatprep.subr.mxu0 0.0
  %327 = vmatpush1.msra.mxu0 0.0
  %328 = vmatprep.subr.mxu0 0.0
  %329 = vmatpush1.msra.mxu0 0.0
  %330 = vmatprep.subr.mxu0 0.0
  %331 = vmatpush1.msra.mxu0 0.0
  %332 = vmatprep.subr.mxu0 0.0
  %333 = vmatpush1.msra.mxu0 0.0
  %334 = vmatprep.subr.mxu0 0.0
  %335 = vmatpush1.msra.mxu0 0.0
  %336 = vmatprep.subr.mxu0 0.0
  %337 = vmatpush1.msra.mxu0 0.0
  %338 = vmatprep.subr.mxu0 0.0
  %339 = vmatpush1.msra.mxu0 0.0
  %340 = vmatprep.subr.mxu0 0.0
  %341 = vmatpush1.msra.mxu0 0.0
  %342 = vmatprep.subr.mxu0 0.0
  %343 = vmatpush1.msra.mxu0 0.0
  %344 = vmatprep.subr.mxu0 0.0
  %345 = vmatpush1.msra.mxu0 0.0
  %346 = vmatprep.subr.mxu0 0.0
  %347 = vmatpush1.msra.mxu0 0.0
  %348 = vmatprep.subr.mxu0 0.0
  %349 = vmatpush1.msra.mxu0 0.0
  %350 = vmatprep.subr.mxu0 0.0
  %351 = vmatpush1.msra.mxu0 0.0
  %352 = vmatprep.subr.mxu0 0.0
  %353 = vmatpush1.msra.mxu0 0.0
  %354 = vmatprep.subr.mxu0 0.0
  %355 = vmatpush1.msra.mxu0 0.0
  %356 = vmatprep.subr.mxu0 0.0
  %357 = vmatpush1.msra.mxu0 0.0
  %358 = vmatprep.mubr.f32.mxu0 0.0
  %359 = vmatmul.mubr.f32.gmra.mrb[0].mxu0 %v273
  %v360 = vpop.f32.mrb[0].mxu0
  %v361 = vadd.f32 0.0, %v360
  %v362 = vpop.f32.mrb[0].mxu0
  %363 = vmatprep.mubr.f32.mxu0 0.0
  %364 = vmatmul.mubr.f32.gmra.mrb[0].mxu0 %v274
  %v365 = vpop.f32.mrb[0].mxu0
  %v366 = vadd.f32 0.0, %v365
  %v367 = vpop.f32.mrb[0].mxu0
  %368 = vmatprep.mubr.f32.mxu0 0.0
  %369 = vmatmul.mubr.f32.gmra.mrb[0].mxu0 %v275
  %v370 = vpop.f32.mrb[0].mxu0
  %v371 = vadd.f32 0.0, %v370
  %v372 = vpop.f32.mrb[0].mxu0
  %373 = vmatprep.mubr.f32.mxu0 0.0
  %374 = vmatmul.mubr.f32.gmra.mrb[0].mxu0 %v276
  %v375 = vpop.f32.mrb[0].mxu0
  %v376 = vadd.f32 0.0, %v375
  %v377 = vpop.f32.mrb[0].mxu0
  %378 = vdwg.mxu0
  %v379 = vadd.f32 %v255, %v361
  %v380 = vadd.f32 %v260, %v366
  %v381 = vadd.f32 %v265, %v371
  %v382 = vadd.f32 %v270, %v376
  %v383 = vpack.c.bf16 %v380, %v379
  %v384 = vpack.c.bf16 %v382, %v381
  %v387 = vunpack.c.l.b16 %v383
  %v388 = vunpack.c.h.b16 %v383
  %v389 = vunpack.c.l.b16 %v384
  %v390 = vunpack.c.h.b16 %v384
  %v391 = vpack.c.b16 %v387, %v387
  %v392 = vpack.c.b16 %v388, %v388
  %v393 = vpack.c.b16 %v389, %v389
  %v394 = vpack.c.b16 %v390, %v390
  %399 = vst [vmem:[%s4] sm:$0xf] %v391
  %400 = vst [vmem:[%s4 + $0x4] sm:$0xf] %v392
  %401 = vst [vmem:[%s4 + $0x8] sm:$0xf] %v393
  %402 = vst [vmem:[%s4 + $0xc] sm:$0xf] %v394
  %v403 = vadd.f32 %v379, %v380
  %v404 = vadd.f32 %v403, %v381
  %v405 = vadd.f32 %v404, %v382
  %v406 = vrot.slane %v405, 4
  %v407 = vadd.f32 %v405, %v406
  %v408 = vrot.slane %v407, 2
  %v409 = vadd.f32 %v407, %v408
  %v410 = vrot.slane %v409, 1
  %v411 = vadd.f32 %v409, %v410
  %412 = vst [vmem:[%s5] sm:$0x1] %v411
  %v413 = vmul.f32 %v379, %v379
  %v414 = vmul.f32 %v380, %v380
  %v415 = vmul.f32 %v381, %v381
  %v416 = vmul.f32 %v382, %v382
  %v417 = vadd.f32 %v413, %v414
  %v418 = vadd.f32 %v417, %v415
  %v419 = vadd.f32 %v418, %v416
  %v420 = vrot.slane %v419, 4
  %v421 = vadd.f32 %v419, %v420
  %v422 = vrot.slane %v421, 2
  %v423 = vadd.f32 %v421, %v422
  %v424 = vrot.slane %v423, 1
  %v425 = vadd.f32 %v423, %v424
  %426 = vst [vmem:[%s6] sm:$0x1] %v425
  // Predicated region
  $region18: #{conv_block_forward.4} parent=0 // pred_check
    _
  $region19: #{conv_block_forward.4} parent=0 // pred_check_branch
    %428 = sbr.rel (0) target = $region21
  $region20: #{conv_block_forward.4} parent=0 // pred_region
    _
  $region21: #{conv_block_forward.4} parent=0 // pred_fallthru
    _
  // Predicated region
  $region22: #{conv_block_forward.4} parent=0 // pred_check
    _
  $region23: #{conv_block_forward.4} parent=0 // pred_check_branch
    %430 = sbr.rel (0) target = $region25
  $region24: #{conv_block_forward.4} parent=0 // pred_region
    _
  $region25: #{conv_block_forward.4} parent=0 // pred_fallthru
    _
  // Predicated region
  $region26: #{conv_block_forward.4} parent=0 // pred_check
    _
  $region27: #{conv_block_forward.4} parent=0 // pred_check_branch
    %432 = sbr.rel (0) target = $region29
  $region28: #{conv_block_forward.4} parent=0 // pred_region
    _
  $region29: #{conv_block_forward.4} parent=0 // pred_fallthru
    _
  // Predicated region
  $region30: #{conv_block_forward.4} parent=0 // pred_check
    _
  $region31: #{conv_block_forward.4} parent=0 // pred_check_branch
    %434 = sbr.rel (0) target = $region33
  $region32: #{conv_block_forward.4} parent=0 // pred_region
    _
  $region33: #{conv_block_forward.4} parent=0 // pred_fallthru
    _
  // Predicated region
  $region34: #{conv_block_forward.4} parent=0 // pred_check
    _
  $region35: #{conv_block_forward.4} parent=0 // pred_check_branch
    %436 = sbr.rel (0) target = $region37
  $region36: #{conv_block_forward.4} parent=0 // pred_region
    _
  $region37: #{conv_block_forward.4} parent=0 // pred_fallthru
    _
  // Predicated region
  $region38: #{conv_block_forward.4} parent=0 // pred_check
    _
  $region39: #{conv_block_forward.4} parent=0 // pred_check_branch
    %438 = sbr.rel (0) target = $region41
  $region40: #{conv_block_forward.4} parent=0 // pred_region
    _
  $region41: #{conv_block_forward.4} parent=0 // pred_fallthru
    _

// kernel: conv_block_forward.5
$region0: #{conv_block_forward.5}
  #allocation0 [shape = 'u32[]', space=smem, size = 0x4, offset = 0x4, fixed_abs, tag = 'smem constant byte address 0x4 - core index']
  #allocation1 [shape = 'u32[144,128]{1,0:T(1,128)}', space=vmem, size = 0x12000, scoped, tag = 'internal scratch']
  %s0 = inlined_call_operand.vmem [shape: bf16[2,16,128], index: 0, kind: input, shape index: {}]
  %s1 = inlined_call_operand.vmem [shape: f32[1,128], index: 1, kind: input, shape index: {}]
  %s2 = inlined_call_operand.vmem [shape: f32[1,128], index: 2, kind: input, shape index: {}]
  %s3 = inlined_call_operand.vmem [shape: f32[2,16,128], index: 3, kind: output, shape index: {}]
  %s4 = sld [smem:[#allocation0]]
  $region22: #{conv_block_forward.5} parent=0
    _
  %s6 = ssub.s32 1, %s4
  %s7 = scalar_select 0, %s6, %s4
  // Predicated region
  $region2: #{conv_block_forward.5} parent=0 // pred_check
    _
  $region3: #{conv_block_forward.5} parent=0 // pred_check_branch
    %9 = sbr.rel (0) target = $region5
  $region4: #{conv_block_forward.5} parent=0 // pred_region
    _
  $region5: #{conv_block_forward.5} parent=0 // pred_fallthru
    _
  // Predicated region
  $region6: #{conv_block_forward.5} parent=0 // pred_check
    _
  $region7: #{conv_block_forward.5} parent=0 // pred_check_branch
    %11 = sbr.rel (0) target = $region9
  $region8: #{conv_block_forward.5} parent=0 // pred_region
    _
  $region9: #{conv_block_forward.5} parent=0 // pred_fallthru
    _
  // Predicated region
  $region10: #{conv_block_forward.5} parent=0 // pred_check
    _
  $region11: #{conv_block_forward.5} parent=0 // pred_check_branch
    %13 = sbr.rel (0) target = $region13
  $region12: #{conv_block_forward.5} parent=0 // pred_region
    _
  $region13: #{conv_block_forward.5} parent=0 // pred_fallthru
    _
  %v14 = vld [vmem:[%s1] sm:$0x1]
  %v15 = vld [vmem:[%s2] sm:$0x1]
  %v16 = vld [vmem:[%s0] sm:$0xf]
  %v17 = vld [vmem:[%s0 + $0x4] sm:$0xf]
  %v18 = vld [vmem:[%s0 + $0x8] sm:$0xf]
  %v19 = vld [vmem:[%s0 + $0xc] sm:$0xf]
  %v20 = vunpack.c.l.bf16 %v16
  %v21 = vunpack.c.l.bf16 %v17
  %v22 = vunpack.c.l.bf16 %v18
  %v23 = vunpack.c.l.bf16 %v19
  %v25 = vlaneseq
  %v26 = vshrl.u32 %v25, 7
  %v27 = vsub.s32 0, %v26
  %v28 = vrot.slane %v14, %v27
  %v30 = vmul.f32 %v20, %v28
  %v31 = vmul.f32 %v21, %v28
  %v32 = vmul.f32 %v22, %v28
  %v33 = vmul.f32 %v23, %v28
  %v35 = vlaneseq
  %v36 = vshrl.u32 %v35, 7
  %v37 = vsub.s32 0, %v36
  %v38 = vrot.slane %v15, %v37
  %v40 = vadd.f32 %v30, %v38
  %v41 = vadd.f32 %v31, %v38
  %v42 = vadd.f32 %v32, %v38
  %v43 = vadd.f32 %v33, %v38
  %v44 = vmax.f32 %v40, 0.0
  %v45 = vmax.f32 %v41, 0.0
  %v46 = vmax.f32 %v42, 0.0
  %v47 = vmax.f32 %v43, 0.0
  %48 = vst [vmem:[%s3] sm:$0xff] %v44
  %49 = vst [vmem:[%s3 + $0x8] sm:$0xff] %v45
  %50 = vst [vmem:[%s3 + $0x10] sm:$0xff] %v46
  %51 = vst [vmem:[%s3 + $0x18] sm:$0xff] %v47
  // Predicated region
  $region14: #{conv_block_forward.5} parent=0 // pred_check
    _
  $region15: #{conv_block_forward.5} parent=0 // pred_check_branch
    %53 = sbr.rel (0) target = $region17
  $region16: #{conv_block_forward.5} parent=0 // pred_region
    _
  $region17: #{conv_block_forward.5} parent=0 // pred_fallthru
    _
  // Predicated region
  $region18: #{conv_block_forward.5} parent=0 // pred_check
    _
  $region19: #{conv_block_forward.5} parent=0 // pred_check_branch
    %55 = sbr.rel (0) target = $region21
  $region20: #{conv_block_forward.5} parent=0 // pred_region
    _
  $region21: #{conv_block_forward.5} parent=0 // pred_fallthru
    _

</llo_original>
